<compile_context>
chip_gen: v7x
topology: tpu7x:2x2x1
jax: 0.10.0
libtpu: 0.0.40
codegen_flags: <defaults>
</compile_context>

<pallas_src>
import functools

import jax
import jax.numpy as jnp
from jax.experimental import pallas as pl
from jax.experimental.pallas import tpu as pltpu


def _round_up(x: int, m: int) -> int:
    return (x + m - 1) // m * m


@functools.lru_cache(maxsize=1)
def _vmem_limit_bytes() -> int:
    """Per-generation scoped-VMEM budget (<= ~3/4 of physical capacity)."""
    try:
        info = pltpu.get_tpu_info()
        cap = getattr(info, "vmem_capacity_bytes", None)
        if cap:
            return int(min(cap * 3 // 4, 96 * 1024 * 1024))
    except Exception:
        pass
    return 48 * 1024 * 1024  # safe on v7x (64 MiB physical) and on v5e/v6e


# ---------------------------------------------------------------------------
# Pass 1: hidden MLP (once per batch tile) + online LSE over corpus tiles.
# Outputs: cached bf16 hidden activations h (n_pad, h3) and per-row lse.
# No (N, C) logits buffer is written to HBM.
# ---------------------------------------------------------------------------
def _mlp_lse_kernel(x_ref,
                    w1_ref, b1_ref,
                    w2_ref, b2_ref,
                    w3_ref, b3_ref,
                    w4_ref, b4_ref,
                    h_ref, lse_ref,
                    m_scr, l_scr):
    j = pl.program_id(1)

    @pl.when(j == 0)
    def _():
        # Hidden MLP (Linear -> ReLU; Dropout == identity in eval mode).
        # bf16 MXU operands, f32 accumulation, f32 elementwise.
        h = jnp.dot(x_ref[...], w1_ref[...],
                    preferred_element_type=jnp.float32) + b1_ref[...]
        h = jnp.maximum(h, 0.0)
        h = jnp.dot(h.astype(w2_ref.dtype), w2_ref[...],
                    preferred_element_type=jnp.float32) + b2_ref[...]
        h = jnp.maximum(h, 0.0)
        h = jnp.dot(h.astype(w3_ref.dtype), w3_ref[...],
                    preferred_element_type=jnp.float32) + b3_ref[...]
        h = jnp.maximum(h, 0.0)
        # Cache bf16 activations in the resident output block: it is reused as
        # the MXU lhs of every corpus tile below with no per-step cast, and it
        # is the only record of h that ever reaches HBM.
        h_ref[...] = h.astype(h_ref.dtype)
        m_scr[...] = jnp.full_like(m_scr, -jnp.inf)
        l_scr[...] = jnp.zeros_like(l_scr)

    # Output projection for this corpus tile (logits never leave VMEM).
    logits = jnp.dot(h_ref[...], w4_ref[...],
                     preferred_element_type=jnp.float32) + b4_ref[...]

    # Online max / sum-exp reduction across corpus tiles.
    m_prev = m_scr[...]
    m_new = jnp.maximum(m_prev, jnp.max(logits, axis=-1, keepdims=True))
    l_scr[...] = (l_scr[...] * jnp.exp(m_prev - m_new)
                  + jnp.sum(jnp.exp(logits - m_new), axis=-1, keepdims=True))
    m_scr[...] = m_new

    @pl.when(j == pl.num_programs(1) - 1)
    def _():
        lse_ref[...] = m_scr[...] + jnp.log(l_scr[...])


# ---------------------------------------------------------------------------
# Pass 2: recompute the output projection from the cached bf16 h and write
# log-probs directly (the only (N, C)-sized HBM stream in the forward).
# ---------------------------------------------------------------------------
def _logprob_kernel(h_ref, w4_ref, b4_ref, lse_ref, out_ref):
    logits = jnp.dot(h_ref[...], w4_ref[...],
                     preferred_element_type=jnp.float32) + b4_ref[...]
    out_ref[...] = (logits - lse_ref[...]).astype(out_ref.dtype)


def prepare_params(params, *, tn=1024, compute_dtype=jnp.bfloat16):
    """One-time weight prep (hoisted out of the per-call path).

    Casts weights to the MXU compute dtype and pads the output projection
    along the corpus axis to a multiple of the corpus tile.  Padded columns
    get zero weights and a -1e30 bias so they never contribute to the softmax
    (finite, so the online LSE never sees inf-inf).
    """
    (w1, b1), (w2, b2), (w3, b3), (w4, b4) = params
    c = w4.shape[1]
    assert tn % 128 == 0, "corpus tile must be a multiple of 128"
    tn_eff = min(tn, _round_up(c, 128))          # still a multiple of 128
    c_pad = _round_up(c, tn_eff)
    w4p, b4p = w4, b4
    if c_pad > c:
        w4p = jnp.pad(w4, ((0, 0), (0, c_pad - c)))
        b4p = jnp.pad(b4, ((0, 0), (0, c_pad - c)), constant_values=-1e30)
    weights = (w1.astype(compute_dtype), b1.astype(jnp.float32),
               w2.astype(compute_dtype), b2.astype(jnp.float32),
               w3.astype(compute_dtype), b3.astype(jnp.float32),
               w4p.astype(compute_dtype), b4p.astype(jnp.float32))
    weights = tuple(jax.device_put(jnp.asarray(w)) for w in weights)
    meta = {"corpus_size": c, "corpus_tile": tn_eff}
    return weights, meta


@functools.partial(jax.jit,
                   static_argnames=("corpus_size", "tm", "tn", "compute_dtype"))
def _embedding_forward_impl(x, w1, b1, w2, b2, w3, b3, w4, b4, *,
                            corpus_size, tm, tn, compute_dtype):
    n, e_s = x.shape
    h1, h2, h3 = w1.shape[1], w2.shape[1], w3.shape[1]
    c_pad = w4.shape[1]
    c = corpus_size
    assert tn % 128 == 0 and c_pad % tn == 0, "corpus tiling misconfigured"

    # Batch tile: multiple of 8, capped at the padded batch.  If the batch
    # would produce a single batch tile, halve tm so the 'parallel' batch axis
    # can be split across v7x's two TensorCores.
    tm = max(8, _round_up(min(tm, _round_up(n, 8)), 8))
    if _round_up(n, tm) // tm < 2:
        tm_half = max(8, _round_up(tm // 2, 8))
        if tm_half < tm and _round_up(n, tm_half) // tm_half >= 2:
            tm = tm_half
    n_pad = _round_up(n, tm)
    nb = n_pad // tm
    nc = c_pad // tn

    if n_pad > n:
        x = jnp.pad(x, ((0, n_pad - n), (0, 0)))
    x = x.astype(compute_dtype)

    vmem_limit = _vmem_limit_bytes()
    itemsize = jnp.dtype(compute_dtype).itemsize

    def full(a):
        # Constant index_map => stays resident in VMEM (no re-DMA across grid).
        return pl.BlockSpec(a.shape, lambda i, j: (0, 0))

    cost1 = pl.CostEstimate(
        flops=int(2 * n_pad * (e_s * h1 + h1 * h2 + h2 * h3 + h3 * c_pad)),
        transcendentals=int(n_pad * c_pad + n_pad),
        bytes_accessed=int(
            x.size * itemsize
            + sum(int(a.size) * a.dtype.itemsize
                  for a in (w1, b1, w2, b2, w3, b3))
            + nb * (int(w4.size) * itemsize + int(b4.size) * 4)
            + n_pad * h3 * itemsize + n_pad * 4))

    h_cached, lse = pl.pallas_call(
        _mlp_lse_kernel,
        out_shape=(jax.ShapeDtypeStruct((n_pad, h3), compute_dtype),
                   jax.ShapeDtypeStruct((n_pad, 1), jnp.float32)),
        grid=(nb, nc),
        in_specs=[
            pl.BlockSpec((tm, e_s), lambda i, j: (i, 0)),   # x: batch tile
            full(w1), full(b1),                             # resident weights
            full(w2), full(b2),
            full(w3), full(b3),
            pl.BlockSpec((h3, tn), lambda i, j: (0, j)),    # w4: corpus tile
            pl.BlockSpec((1, tn), lambda i, j: (0, j)),     # b4: corpus tile
        ],
        out_specs=(
            pl.BlockSpec((tm, h3), lambda i, j: (i, 0)),    # cached bf16 h
            pl.BlockSpec((tm, 1), lambda i, j: (i, 0)),     # per-row lse
        ),
        scratch_shapes=[
            pltpu.VMEM((tm, 1), jnp.float32),   # running max
            pltpu.VMEM((tm, 1), jnp.float32),   # running sum-exp
        ],
        compiler_params=pltpu.CompilerParams(
            dimension_semantics=("parallel", "arbitrary"),
            vmem_limit_bytes=vmem_limit),
        cost_estimate=cost1,
    )(x, w1, b1, w2, b2, w3, b3, w4, b4)

    # Pass-2 grid-major order: pick whichever re-streams fewer bytes.
    #   batch-major : w4 tile re-fetched every step, h resident per batch tile
    #   corpus-major: h re-fetched every step, w4 tile resident per corpus tile
    corpus_major = (h3 / tn + h3 / n_pad) < (h3 / tm + h3 / c_pad)
    if corpus_major:
        grid2 = (nc, nb)
        in_specs2 = [
            pl.BlockSpec((tm, h3), lambda j, i: (i, 0)),
            pl.BlockSpec((h3, tn), lambda j, i: (0, j)),
            pl.BlockSpec((1, tn), lambda j, i: (0, j)),
            pl.BlockSpec((tm, 1), lambda j, i: (i, 0)),
        ]
        out_spec2 = pl.BlockSpec((tm, tn), lambda j, i: (i, j))
        streamed = nc * n_pad * h3 * itemsize + int(w4.size) * itemsize
    else:
        grid2 = (nb, nc)
        in_specs2 = [
            pl.BlockSpec((tm, h3), lambda i, j: (i, 0)),
            pl.BlockSpec((h3, tn), lambda i, j: (0, j)),
            pl.BlockSpec((1, tn), lambda i, j: (0, j)),
            pl.BlockSpec((tm, 1), lambda i, j: (i, 0)),
        ]
        out_spec2 = pl.BlockSpec((tm, tn), lambda i, j: (i, j))
        streamed = nb * int(w4.size) * itemsize + n_pad * h3 * itemsize

    cost2 = pl.CostEstimate(
        flops=int(2 * n_pad * h3 * c_pad),
        transcendentals=0,
        bytes_accessed=int(streamed + n_pad * c_pad * 4 + n_pad * 4))

    log_probs = pl.pallas_call(
        _logprob_kernel,
        out_shape=jax.ShapeDtypeStruct((n_pad, c_pad), jnp.float32),
        grid=grid2,
        in_specs=in_specs2,
        out_specs=out_spec2,
        compiler_params=pltpu.CompilerParams(
            dimension_semantics=("parallel", "parallel"),
            vmem_limit_bytes=vmem_limit),
        cost_estimate=cost2,
    )(h_cached, w4, b4, lse)

    return log_probs[:n, :c]


def embedding_forward(dense_embedding, prepared, *, tm=256,
                      compute_dtype=jnp.bfloat16):
    """Pallas forward: (N, e_s) -> (N, corpus_size) log-probabilities.

    `prepared` must come from prepare_params() (weights cast/padded once)."""
    weights, meta = prepared
    return _embedding_forward_impl(
        dense_embedding, *weights,
        corpus_size=meta["corpus_size"], tm=tm, tn=meta["corpus_tile"],
        compute_dtype=compute_dtype)


def init_params(key, embedding_size, sizes, corpus_size):
    """Deterministic Kaiming-uniform-ish init (matches torch.nn.Linear ranges).
    Weights stored as (in, out): y = x @ W + b."""
    dims = [embedding_size] + list(sizes) + [corpus_size]
    params = []
    for i in range(len(dims) - 1):
        key, kw, kb = jax.random.split(key, 3)
        fan_in, fan_out = dims[i], dims[i + 1]
        bound = 1.0 / jnp.sqrt(fan_in)
        w = jax.random.uniform(kw, (fan_in, fan_out), jnp.float32, -bound, bound)
        b = jax.random.uniform(kb, (1, fan_out), jnp.float32, -bound, bound)
        params.append((w, b))
    return params


def reference_forward(x, params, compute_dtype=jnp.bfloat16):
    """Pure-JAX reference with the same bf16-in / f32-accumulate contract."""
    h = x
    n_layers = len(params)
    for i, (w, b) in enumerate(params):
        h = jnp.dot(h.astype(compute_dtype), w.astype(compute_dtype),
                    preferred_element_type=jnp.float32) + b
        if i < n_layers - 1:
            h = jnp.maximum(h, 0.0)   # ReLU; Dropout == identity in eval mode
    return jax.nn.log_softmax(h, axis=-1)


if __name__ == "__main__":
    # Small but layout-friendly shapes consistent with Embedding.forward
    batch = 8                 # N tokens
    embedding_size = 32       # e_s
    corpus_size = 256         # c_s
    sizes = [128, 256, 512]   # hidden layer widths of the encoding MLP

    key = jax.random.PRNGKey(0)
    key, kx = jax.random.split(key)

    params = init_params(key, embedding_size, sizes, corpus_size)
    dense_embedding = jax.random.normal(kx, (batch, embedding_size), jnp.float32)

    prepared = prepare_params(params)                 # one-time weight prep
    out = embedding_forward(dense_embedding, prepared)
    out = jax.block_until_ready(out)

    ref = reference_forward(dense_embedding, params)
    assert out.shape == (batch, corpus_size)
    # log-probabilities must (log-)normalize to ~0 per row
    row_lse = jax.scipy.special.logsumexp(out, axis=-1)
    assert jnp.allclose(row_lse, 0.0, atol=1e-3), "rows not log-normalized"
    assert jnp.allclose(out, ref, atol=1e-2, rtol=1e-2), "mismatch vs reference"

    print("KERNEL_OK")
</pallas_src>

<mosaic_0001>
module attributes {stable_mosaic.version = 11 : i64} {
  func.func @_logprob_kernel(%arg0: i32, %arg1: i32, %arg2: memref<8x512xbf16, #tpu.memory_space<vmem>>, %arg3: memref<512x256xbf16, #tpu.memory_space<vmem>>, %arg4: memref<1x256xf32, #tpu.memory_space<vmem>>, %arg5: memref<8x1xf32, #tpu.memory_space<vmem>>, %arg6: memref<8x256xf32, #tpu.memory_space<vmem>>) attributes {dimension_semantics = [#tpu.dimension_semantics<parallel>, #tpu.dimension_semantics<parallel>], iteration_bounds = array<i64: 1, 1>, scalar_prefetch = 0 : i64, scratch_operands = 0 : i64, tpu.core_type = #tpu.core_type<tc>, window_params = [{transform_indices = @transform_0, window_bounds = array<i64: 8, 512>}, {transform_indices = @transform_1, window_bounds = array<i64: 512, 256>}, {transform_indices = @transform_2, window_bounds = array<i64: 1, 256>}, {transform_indices = @transform_3, window_bounds = array<i64: 8, 1>}, {transform_indices = @transform_4, window_bounds = array<i64: 8, 256>}]} {
    %c0 = arith.constant 0 : index
    %c0_0 = arith.constant 0 : index
    %0 = vector.load %arg2[%c0, %c0_0] : memref<8x512xbf16, #tpu.memory_space<vmem>>, vector<8x512xbf16>
    %c0_1 = arith.constant 0 : index
    %c0_2 = arith.constant 0 : index
    %1 = vector.load %arg3[%c0_1, %c0_2] : memref<512x256xbf16, #tpu.memory_space<vmem>>, vector<512x256xbf16>
    %cst = arith.constant dense<0.000000e+00> : vector<8x256xf32>
    %2 = tpu.matmul %0, %1, %cst {dimension_numbers = #tpu.dot_dimension_numbers<[1], [0], [0], [1], [0, 0, 1, 1], [], []>} : vector<8x512xbf16>, vector<512x256xbf16>, vector<8x256xf32> -> vector<8x256xf32>
    %c0_3 = arith.constant 0 : index
    %c0_4 = arith.constant 0 : index
    %3 = vector.load %arg4[%c0_3, %c0_4] : memref<1x256xf32, #tpu.memory_space<vmem>>, vector<1x256xf32>
    %4 = vector.broadcast %3 : vector<1x256xf32> to vector<8x256xf32>
    %5 = arith.addf %2, %4 : vector<8x256xf32>
    %c0_5 = arith.constant 0 : index
    %c0_6 = arith.constant 0 : index
    %6 = vector.load %arg5[%c0_5, %c0_6] : memref<8x1xf32, #tpu.memory_space<vmem>>, vector<8x1xf32>
    %7 = vector.broadcast %6 : vector<8x1xf32> to vector<8x256xf32>
    %8 = arith.subf %5, %7 : vector<8x256xf32>
    %c0_7 = arith.constant 0 : index
    %c0_8 = arith.constant 0 : index
    %9 = vector.load %arg6[%c0_7, %c0_8] : memref<8x256xf32, #tpu.memory_space<vmem>>, vector<8x256xf32>
    tpu.vector_store %arg6[%c0_7, %c0_8], %8 {strides = array<i32>} : memref<8x256xf32, #tpu.memory_space<vmem>>, vector<8x256xf32>,
    return
  }
  func.func @transform_0(%arg0: i32, %arg1: i32) -> (i32, i32) {
    %c0_i32 = arith.constant 0 : i32
    %c0_i32_0 = arith.constant 0 : i32
    return %arg0, %c0_i32 : i32, i32
  }
  func.func @transform_1(%arg0: i32, %arg1: i32) -> (i32, i32) {
    %c0_i32 = arith.constant 0 : i32
    %c0_i32_0 = arith.constant 0 : i32
    return %c0_i32, %arg1 : i32, i32
  }
  func.func @transform_2(%arg0: i32, %arg1: i32) -> (i32, i32) {
    %c0_i32 = arith.constant 0 : i32
    %c0_i32_0 = arith.constant 0 : i32
    return %c0_i32, %arg1 : i32, i32
  }
  func.func @transform_3(%arg0: i32, %arg1: i32) -> (i32, i32) {
    %c0_i32 = arith.constant 0 : i32
    %c0_i32_0 = arith.constant 0 : i32
    return %arg0, %c0_i32 : i32, i32
  }
  func.func @transform_4(%arg0: i32, %arg1: i32) -> (i32, i32) {
    %c0_i32 = arith.constant 0 : i32
    return %arg0, %arg1 : i32, i32
  }
}

module attributes {stable_mosaic.version = 11 : i64} {
  func.func @_mlp_lse_kernel(%arg0: i32, %arg1: i32, %arg2: memref<8x32xbf16, #tpu.memory_space<vmem>>, %arg3: memref<32x128xbf16, #tpu.memory_space<vmem>>, %arg4: memref<1x128xf32, #tpu.memory_space<vmem>>, %arg5: memref<128x256xbf16, #tpu.memory_space<vmem>>, %arg6: memref<1x256xf32, #tpu.memory_space<vmem>>, %arg7: memref<256x512xbf16, #tpu.memory_space<vmem>>, %arg8: memref<1x512xf32, #tpu.memory_space<vmem>>, %arg9: memref<512x256xbf16, #tpu.memory_space<vmem>>, %arg10: memref<1x256xf32, #tpu.memory_space<vmem>>, %arg11: memref<8x512xbf16, #tpu.memory_space<vmem>>, %arg12: memref<8x1xf32, #tpu.memory_space<vmem>>, %arg13: memref<8x1xf32, #tpu.memory_space<vmem>>, %arg14: memref<8x1xf32, #tpu.memory_space<vmem>>) attributes {dimension_semantics = [#tpu.dimension_semantics<parallel>, #tpu.dimension_semantics<arbitrary>], iteration_bounds = array<i64: 1, 1>, scalar_prefetch = 0 : i64, scratch_operands = 2 : i64, tpu.core_type = #tpu.core_type<tc>, window_params = [{transform_indices = @transform_0, window_bounds = array<i64: 8, 32>}, {pipeline_mode = #tpu.pipeline_mode<synchronous>, transform_indices = @transform_1, window_bounds = array<i64: 32, 128>}, {pipeline_mode = #tpu.pipeline_mode<synchronous>, transform_indices = @transform_2, window_bounds = array<i64: 1, 128>}, {pipeline_mode = #tpu.pipeline_mode<synchronous>, transform_indices = @transform_3, window_bounds = array<i64: 128, 256>}, {pipeline_mode = #tpu.pipeline_mode<synchronous>, transform_indices = @transform_4, window_bounds = array<i64: 1, 256>}, {pipeline_mode = #tpu.pipeline_mode<synchronous>, transform_indices = @transform_5, window_bounds = array<i64: 256, 512>}, {pipeline_mode = #tpu.pipeline_mode<synchronous>, transform_indices = @transform_6, window_bounds = array<i64: 1, 512>}, {transform_indices = @transform_7, window_bounds = array<i64: 512, 256>}, {transform_indices = @transform_8, window_bounds = array<i64: 1, 256>}, {transform_indices = @transform_9, window_bounds = array<i64: 8, 512>}, {transform_indices = @transform_10, window_bounds = array<i64: 8, 1>}]} {
    %c0_i32 = arith.constant 0 : i32
    %0 = arith.cmpi eq, %arg1, %c0_i32 : i32
    %1 = arith.extui %0 : i1 to i32
    %c0_i32_0 = arith.constant 0 : i32
    %2 = arith.cmpi ne, %1, %c0_i32_0 : i32
    scf.if %2 {
      %c0_18 = arith.constant 0 : index
      %c0_19 = arith.constant 0 : index
      %28 = vector.load %arg2[%c0_18, %c0_19] : memref<8x32xbf16, #tpu.memory_space<vmem>>, vector<8x32xbf16>
      %c0_20 = arith.constant 0 : index
      %c0_21 = arith.constant 0 : index
      %29 = vector.load %arg3[%c0_20, %c0_21] : memref<32x128xbf16, #tpu.memory_space<vmem>>, vector<32x128xbf16>
      %cst_22 = arith.constant dense<0.000000e+00> : vector<8x128xf32>
      %30 = tpu.matmul %28, %29, %cst_22 {dimension_numbers = #tpu.dot_dimension_numbers<[1], [0], [0], [1], [0, 0, 1, 1], [], []>} : vector<8x32xbf16>, vector<32x128xbf16>, vector<8x128xf32> -> vector<8x128xf32>
      %c0_23 = arith.constant 0 : index
      %c0_24 = arith.constant 0 : index
      %31 = vector.load %arg4[%c0_23, %c0_24] : memref<1x128xf32, #tpu.memory_space<vmem>>, vector<1x128xf32>
      %32 = vector.broadcast %31 : vector<1x128xf32> to vector<8x128xf32>
      %33 = arith.addf %30, %32 : vector<8x128xf32>
      %cst_25 = arith.constant 0.000000e+00 : f32
      %34 = vector.broadcast %cst_25 : f32 to vector<8x128xf32>
      %35 = arith.maximumf %33, %34 : vector<8x128xf32>
      %36 = arith.truncf %35 : vector<8x128xf32> to vector<8x128xbf16>
      %c0_26 = arith.constant 0 : index
      %c0_27 = arith.constant 0 : index
      %37 = vector.load %arg5[%c0_26, %c0_27] : memref<128x256xbf16, #tpu.memory_space<vmem>>, vector<128x256xbf16>
      %cst_28 = arith.constant dense<0.000000e+00> : vector<8x256xf32>
      %38 = tpu.matmul %36, %37, %cst_28 {dimension_numbers = #tpu.dot_dimension_numbers<[1], [0], [0], [1], [0, 0, 1, 1], [], []>} : vector<8x128xbf16>, vector<128x256xbf16>, vector<8x256xf32> -> vector<8x256xf32>
      %c0_29 = arith.constant 0 : index
      %c0_30 = arith.constant 0 : index
      %39 = vector.load %arg6[%c0_29, %c0_30] : memref<1x256xf32, #tpu.memory_space<vmem>>, vector<1x256xf32>
      %40 = vector.broadcast %39 : vector<1x256xf32> to vector<8x256xf32>
      %41 = arith.addf %38, %40 : vector<8x256xf32>
      %cst_31 = arith.constant 0.000000e+00 : f32
      %42 = vector.broadcast %cst_31 : f32 to vector<8x256xf32>
      %43 = arith.maximumf %41, %42 : vector<8x256xf32>
      %44 = arith.truncf %43 : vector<8x256xf32> to vector<8x256xbf16>
      %c0_32 = arith.constant 0 : index
      %c0_33 = arith.constant 0 : index
      %45 = vector.load %arg7[%c0_32, %c0_33] : memref<256x512xbf16, #tpu.memory_space<vmem>>, vector<256x512xbf16>
      %cst_34 = arith.constant dense<0.000000e+00> : vector<8x512xf32>
      %46 = tpu.matmul %44, %45, %cst_34 {dimension_numbers = #tpu.dot_dimension_numbers<[1], [0], [0], [1], [0, 0, 1, 1], [], []>} : vector<8x256xbf16>, vector<256x512xbf16>, vector<8x512xf32> -> vector<8x512xf32>
      %c0_35 = arith.constant 0 : index
      %c0_36 = arith.constant 0 : index
      %47 = vector.load %arg8[%c0_35, %c0_36] : memref<1x512xf32, #tpu.memory_space<vmem>>, vector<1x512xf32>
      %48 = vector.broadcast %47 : vector<1x512xf32> to vector<8x512xf32>
      %49 = arith.addf %46, %48 : vector<8x512xf32>
      %cst_37 = arith.constant 0.000000e+00 : f32
      %50 = vector.broadcast %cst_37 : f32 to vector<8x512xf32>
      %51 = arith.maximumf %49, %50 : vector<8x512xf32>
      %52 = arith.truncf %51 : vector<8x512xf32> to vector<8x512xbf16>
      %c0_38 = arith.constant 0 : index
      %c0_39 = arith.constant 0 : index
      %53 = vector.load %arg11[%c0_38, %c0_39] : memref<8x512xbf16, #tpu.memory_space<vmem>>, vector<8x512xbf16>
      tpu.vector_store %arg11[%c0_38, %c0_39], %52 {strides = array<i32>} : memref<8x512xbf16, #tpu.memory_space<vmem>>, vector<8x512xbf16>,
      %cst_40 = arith.constant 0xFF800000 : f32
      %54 = vector.broadcast %cst_40 : f32 to vector<8x1xf32>
      %c0_41 = arith.constant 0 : index
      %c0_42 = arith.constant 0 : index
      %55 = vector.load %arg13[%c0_41, %c0_42] : memref<8x1xf32, #tpu.memory_space<vmem>>, vector<8x1xf32>
      tpu.vector_store %arg13[%c0_41, %c0_42], %54 {strides = array<i32>} : memref<8x1xf32, #tpu.memory_space<vmem>>, vector<8x1xf32>,
      %cst_43 = arith.constant 0.000000e+00 : f32
      %56 = vector.broadcast %cst_43 : f32 to vector<8x1xf32>
      %c0_44 = arith.constant 0 : index
      %c0_45 = arith.constant 0 : index
      %57 = vector.load %arg14[%c0_44, %c0_45] : memref<8x1xf32, #tpu.memory_space<vmem>>, vector<8x1xf32>
      tpu.vector_store %arg14[%c0_44, %c0_45], %56 {strides = array<i32>} : memref<8x1xf32, #tpu.memory_space<vmem>>, vector<8x1xf32>,
    } else {
    }
    %c0 = arith.constant 0 : index
    %c0_1 = arith.constant 0 : index
    %3 = vector.load %arg11[%c0, %c0_1] : memref<8x512xbf16, #tpu.memory_space<vmem>>, vector<8x512xbf16>
    %c0_2 = arith.constant 0 : index
    %c0_3 = arith.constant 0 : index
    %4 = vector.load %arg9[%c0_2, %c0_3] : memref<512x256xbf16, #tpu.memory_space<vmem>>, vector<512x256xbf16>
    %cst = arith.constant dense<0.000000e+00> : vector<8x256xf32>
    %5 = tpu.matmul %3, %4, %cst {dimension_numbers = #tpu.dot_dimension_numbers<[1], [0], [0], [1], [0, 0, 1, 1], [], []>} : vector<8x512xbf16>, vector<512x256xbf16>, vector<8x256xf32> -> vector<8x256xf32>
    %c0_4 = arith.constant 0 : index
    %c0_5 = arith.constant 0 : index
    %6 = vector.load %arg10[%c0_4, %c0_5] : memref<1x256xf32, #tpu.memory_space<vmem>>, vector<1x256xf32>
    %7 = vector.broadcast %6 : vector<1x256xf32> to vector<8x256xf32>
    %8 = arith.addf %5, %7 : vector<8x256xf32>
    %c0_6 = arith.constant 0 : index
    %c0_7 = arith.constant 0 : index
    %9 = vector.load %arg13[%c0_6, %c0_7] : memref<8x1xf32, #tpu.memory_space<vmem>>, vector<8x1xf32>
    %cst_8 = arith.constant dense<0xFF800000> : vector<8xf32>
    %10 = vector.multi_reduction <maximumf>, %8, %cst_8 [1] : vector<8x256xf32> to vector<8xf32>
    %11 = vector.shape_cast %10 : vector<8xf32> to vector<8x1xf32>
    %12 = arith.maximumf %9, %11 : vector<8x1xf32>
    %c0_9 = arith.constant 0 : index
    %c0_10 = arith.constant 0 : index
    %13 = vector.load %arg14[%c0_9, %c0_10] : memref<8x1xf32, #tpu.memory_space<vmem>>, vector<8x1xf32>
    %14 = arith.subf %9, %12 : vector<8x1xf32>
    %15 = math.exp %14 : vector<8x1xf32>
    %16 = arith.mulf %13, %15 : vector<8x1xf32>
    %17 = vector.broadcast %12 : vector<8x1xf32> to vector<8x256xf32>
    %18 = arith.subf %8, %17 : vector<8x256xf32>
    %19 = math.exp %18 : vector<8x256xf32>
    %cst_11 = arith.constant dense<0.000000e+00> : vector<8xf32>
    %20 = vector.multi_reduction <add>, %19, %cst_11 [1] : vector<8x256xf32> to vector<8xf32>
    %21 = vector.shape_cast %20 : vector<8xf32> to vector<8x1xf32>
    %22 = arith.addf %16, %21 : vector<8x1xf32>
    %c0_12 = arith.constant 0 : index
    %c0_13 = arith.constant 0 : index
    %23 = vector.load %arg14[%c0_12, %c0_13] : memref<8x1xf32, #tpu.memory_space<vmem>>, vector<8x1xf32>
    tpu.vector_store %arg14[%c0_12, %c0_13], %22 {strides = array<i32>} : memref<8x1xf32, #tpu.memory_space<vmem>>, vector<8x1xf32>,
    %c0_14 = arith.constant 0 : index
    %c0_15 = arith.constant 0 : index
    %24 = vector.load %arg13[%c0_14, %c0_15] : memref<8x1xf32, #tpu.memory_space<vmem>>, vector<8x1xf32>
    tpu.vector_store %arg13[%c0_14, %c0_15], %12 {strides = array<i32>} : memref<8x1xf32, #tpu.memory_space<vmem>>, vector<8x1xf32>,
    %c0_i32_16 = arith.constant 0 : i32
    %25 = arith.cmpi eq, %arg1, %c0_i32_16 : i32
    %26 = arith.extui %25 : i1 to i32
    %c0_i32_17 = arith.constant 0 : i32
    %27 = arith.cmpi ne, %26, %c0_i32_17 : i32
    scf.if %27 {
      %c0_18 = arith.constant 0 : index
      %c0_19 = arith.constant 0 : index
      %28 = vector.load %arg13[%c0_18, %c0_19] : memref<8x1xf32, #tpu.memory_space<vmem>>, vector<8x1xf32>
      %c0_20 = arith.constant 0 : index
      %c0_21 = arith.constant 0 : index
      %29 = vector.load %arg14[%c0_20, %c0_21] : memref<8x1xf32, #tpu.memory_space<vmem>>, vector<8x1xf32>
      %30 = math.log %29 : vector<8x1xf32>
      %31 = arith.addf %28, %30 : vector<8x1xf32>
      %c0_22 = arith.constant 0 : index
      %c0_23 = arith.constant 0 : index
      %32 = vector.load %arg12[%c0_22, %c0_23] : memref<8x1xf32, #tpu.memory_space<vmem>>, vector<8x1xf32>
      tpu.vector_store %arg12[%c0_22, %c0_23], %31 {strides = array<i32>} : memref<8x1xf32, #tpu.memory_space<vmem>>, vector<8x1xf32>,
    } else {
    }
    return
  }
  func.func @transform_0(%arg0: i32, %arg1: i32) -> (i32, i32) {
    %c0_i32 = arith.constant 0 : i32
    %c0_i32_0 = arith.constant 0 : i32
    return %arg0, %c0_i32 : i32, i32
  }
  func.func @transform_1(%arg0: i32, %arg1: i32) -> (i32, i32) {
    %c0_i32 = arith.constant 0 : i32
    %c0_i32_0 = arith.constant 0 : i32
    %c0_i32_1 = arith.constant 0 : i32
    return %c0_i32, %c0_i32_0 : i32, i32
  }
  func.func @transform_2(%arg0: i32, %arg1: i32) -> (i32, i32) {
    %c0_i32 = arith.constant 0 : i32
    %c0_i32_0 = arith.constant 0 : i32
    %c0_i32_1 = arith.constant 0 : i32
    return %c0_i32, %c0_i32_0 : i32, i32
  }
  func.func @transform_3(%arg0: i32, %arg1: i32) -> (i32, i32) {
    %c0_i32 = arith.constant 0 : i32
    %c0_i32_0 = arith.constant 0 : i32
    %c0_i32_1 = arith.constant 0 : i32
    return %c0_i32, %c0_i32_0 : i32, i32
  }
  func.func @transform_4(%arg0: i32, %arg1: i32) -> (i32, i32) {
    %c0_i32 = arith.constant 0 : i32
    %c0_i32_0 = arith.constant 0 : i32
    %c0_i32_1 = arith.constant 0 : i32
    return %c0_i32, %c0_i32_0 : i32, i32
  }
  func.func @transform_5(%arg0: i32, %arg1: i32) -> (i32, i32) {
    %c0_i32 = arith.constant 0 : i32
    %c0_i32_0 = arith.constant 0 : i32
    %c0_i32_1 = arith.constant 0 : i32
    return %c0_i32, %c0_i32_0 : i32, i32
  }
  func.func @transform_6(%arg0: i32, %arg1: i32) -> (i32, i32) {
    %c0_i32 = arith.constant 0 : i32
    %c0_i32_0 = arith.constant 0 : i32
    %c0_i32_1 = arith.constant 0 : i32
    return %c0_i32, %c0_i32_0 : i32, i32
  }
  func.func @transform_7(%arg0: i32, %arg1: i32) -> (i32, i32) {
    %c0_i32 = arith.constant 0 : i32
    %c0_i32_0 = arith.constant 0 : i32
    return %c0_i32, %arg1 : i32, i32
  }
  func.func @transform_8(%arg0: i32, %arg1: i32) -> (i32, i32) {
    %c0_i32 = arith.constant 0 : i32
    %c0_i32_0 = arith.constant 0 : i32
    return %c0_i32, %arg1 : i32, i32
  }
  func.func @transform_9(%arg0: i32, %arg1: i32) -> (i32, i32) {
    %c0_i32 = arith.constant 0 : i32
    %c0_i32_0 = arith.constant 0 : i32
    return %arg0, %c0_i32 : i32, i32
  }
  func.func @transform_10(%arg0: i32, %arg1: i32) -> (i32, i32) {
    %c0_i32 = arith.constant 0 : i32
    %c0_i32_0 = arith.constant 0 : i32
    return %arg0, %c0_i32 : i32, i32
  }
}

</mosaic_0001>

<llo_original>
// kernel: _embedding_forward_impl.3
$region0: #{_embedding_forward_impl.3}
  #allocation0 [shape = 'u32[]', space=smem, size = 0x4, offset = 0x4, fixed_abs, tag = 'smem constant byte address 0x4 - core index']
  #allocation1 [shape = 'u32[144,128]{1,0:T(1,128)}', space=vmem, size = 0x12000, scoped, tag = 'internal scratch']
  %s0 = inlined_call_operand.vmem [shape: bf16[8,512], index: 0, kind: input, shape index: {}]
  %s1 = inlined_call_operand.vmem [shape: bf16[512,256], index: 1, kind: input, shape index: {}]
  %s2 = inlined_call_operand.vmem [shape: f32[1,256], index: 2, kind: input, shape index: {}]
  %s3 = inlined_call_operand.vmem [shape: f32[8,1], index: 3, kind: input, shape index: {}]
  %s4 = inlined_call_operand.hbm [shape: f32[8,256], index: 4, kind: output, shape index: {}]
  %s5 = sld [smem:[#allocation0]]
  $region26: #{_embedding_forward_impl.3} parent=0
    _
  %s7 = ssub.s32 1, %s5
  %s8 = scalar_select 0, %s7, %s5
  $region1: #{_embedding_forward_impl.3} parent=0
    #allocation2 [shape = 'u8[8192]{0}', space=vmem, size = 0x2000, scoped, tag = 'output window, operand 0, single buffered']
    #allocation3 [shape = 's32[1]{0}', space=sflag, size = 0x4, scoped, tag = 'scoped memory for _embedding_forward_impl.3']
    %9 = vsyncpa [#allocation3], 0
    // Predicated region
    $region2: #{_embedding_forward_impl.3} parent=1 // pred_check
      _
    $region3: #{_embedding_forward_impl.3} parent=1 // pred_check_branch
      %11 = sbr.rel (0) target = $region5
    $region4: #{_embedding_forward_impl.3} parent=1 // pred_region
      _
    $region5: #{_embedding_forward_impl.3} parent=1 // pred_fallthru
      _
    // Predicated region
    $region6: #{_embedding_forward_impl.3} parent=1 // pred_check
      _
    $region7: #{_embedding_forward_impl.3} parent=1 // pred_check_branch
      %13 = sbr.rel (0) target = $region9
    $region8: #{_embedding_forward_impl.3} parent=1 // pred_region
      _
    $region9: #{_embedding_forward_impl.3} parent=1 // pred_fallthru
      _
    // Predicated region
    $region10: #{_embedding_forward_impl.3} parent=1 // pred_check
      _
    $region11: #{_embedding_forward_impl.3} parent=1 // pred_check_branch
      %15 = sbr.rel (0) target = $region13
    $region12: #{_embedding_forward_impl.3} parent=1 // pred_region
      _
    $region13: #{_embedding_forward_impl.3} parent=1 // pred_fallthru
      _
    // Predicated region
    $region14: #{_embedding_forward_impl.3} parent=1 // pred_check
      _
    $region15: #{_embedding_forward_impl.3} parent=1 // pred_check_branch
      %17 = sbr.rel (0) target = $region17
    $region16: #{_embedding_forward_impl.3} parent=1 // pred_region
      _
    $region17: #{_embedding_forward_impl.3} parent=1 // pred_fallthru
      _
    %v18 = vld [vmem:[%s0] sm:$0xff]
    %v19 = vld [vmem:[%s0 + $0x8] sm:$0xff]
    %v20 = vld [vmem:[%s1] sm:$0xff]
    %v21 = vld [vmem:[%s1 + $0x8] sm:$0xff]
    %v22 = vld [vmem:[%s1 + $0x10] sm:$0xff]
    %v23 = vld [vmem:[%s1 + $0x18] sm:$0xff]
    %v24 = vld [vmem:[%s1 + $0x20] sm:$0xff]
    %v25 = vld [vmem:[%s1 + $0x28] sm:$0xff]
    %v26 = vld [vmem:[%s1 + $0x30] sm:$0xff]
    %v27 = vld [vmem:[%s1 + $0x38] sm:$0xff]
    %v28 = vld [vmem:[%s1 + $0x40] sm:$0xff]
    %v29 = vld [vmem:[%s1 + $0x48] sm:$0xff]
    %v30 = vld [vmem:[%s1 + $0x50] sm:$0xff]
    %v31 = vld [vmem:[%s1 + $0x58] sm:$0xff]
    %v32 = vld [vmem:[%s1 + $0x60] sm:$0xff]
    %v33 = vld [vmem:[%s1 + $0x68] sm:$0xff]
    %v34 = vld [vmem:[%s1 + $0x70] sm:$0xff]
    %v35 = vld [vmem:[%s1 + $0x78] sm:$0xff]
    %v36 = vld [vmem:[%s1 + $0x80] sm:$0xff]
    %v37 = vld [vmem:[%s1 + $0x88] sm:$0xff]
    %v38 = vld [vmem:[%s1 + $0x90] sm:$0xff]
    %v39 = vld [vmem:[%s1 + $0x98] sm:$0xff]
    %v40 = vld [vmem:[%s1 + $0xa0] sm:$0xff]
    %v41 = vld [vmem:[%s1 + $0xa8] sm:$0xff]
    %v42 = vld [vmem:[%s1 + $0xb0] sm:$0xff]
    %v43 = vld [vmem:[%s1 + $0xb8] sm:$0xff]
    %v44 = vld [vmem:[%s1 + $0xc0] sm:$0xff]
    %v45 = vld [vmem:[%s1 + $0xc8] sm:$0xff]
    %v46 = vld [vmem:[%s1 + $0xd0] sm:$0xff]
    %v47 = vld [vmem:[%s1 + $0xd8] sm:$0xff]
    %v48 = vld [vmem:[%s1 + $0xe0] sm:$0xff]
    %v49 = vld [vmem:[%s1 + $0xe8] sm:$0xff]
    %v50 = vld [vmem:[%s1 + $0xf0] sm:$0xff]
    %v51 = vld [vmem:[%s1 + $0xf8] sm:$0xff]
    %v52 = vld [vmem:[%s1 + $0x100] sm:$0xff]
    %v53 = vld [vmem:[%s1 + $0x108] sm:$0xff]
    %v54 = vld [vmem:[%s1 + $0x110] sm:$0xff]
    %v55 = vld [vmem:[%s1 + $0x118] sm:$0xff]
    %v56 = vld [vmem:[%s1 + $0x120] sm:$0xff]
    %v57 = vld [vmem:[%s1 + $0x128] sm:$0xff]
    %v58 = vld [vmem:[%s1 + $0x130] sm:$0xff]
    %v59 = vld [vmem:[%s1 + $0x138] sm:$0xff]
    %v60 = vld [vmem:[%s1 + $0x140] sm:$0xff]
    %v61 = vld [vmem:[%s1 + $0x148] sm:$0xff]
    %v62 = vld [vmem:[%s1 + $0x150] sm:$0xff]
    %v63 = vld [vmem:[%s1 + $0x158] sm:$0xff]
    %v64 = vld [vmem:[%s1 + $0x160] sm:$0xff]
    %v65 = vld [vmem:[%s1 + $0x168] sm:$0xff]
    %v66 = vld [vmem:[%s1 + $0x170] sm:$0xff]
    %v67 = vld [vmem:[%s1 + $0x178] sm:$0xff]
    %v68 = vld [vmem:[%s1 + $0x180] sm:$0xff]
    %v69 = vld [vmem:[%s1 + $0x188] sm:$0xff]
    %v70 = vld [vmem:[%s1 + $0x190] sm:$0xff]
    %v71 = vld [vmem:[%s1 + $0x198] sm:$0xff]
    %v72 = vld [vmem:[%s1 + $0x1a0] sm:$0xff]
    %v73 = vld [vmem:[%s1 + $0x1a8] sm:$0xff]
    %v74 = vld [vmem:[%s1 + $0x1b0] sm:$0xff]
    %v75 = vld [vmem:[%s1 + $0x1b8] sm:$0xff]
    %v76 = vld [vmem:[%s1 + $0x1c0] sm:$0xff]
    %v77 = vld [vmem:[%s1 + $0x1c8] sm:$0xff]
    %v78 = vld [vmem:[%s1 + $0x1d0] sm:$0xff]
    %v79 = vld [vmem:[%s1 + $0x1d8] sm:$0xff]
    %v80 = vld [vmem:[%s1 + $0x1e0] sm:$0xff]
    %v81 = vld [vmem:[%s1 + $0x1e8] sm:$0xff]
    %v82 = vld [vmem:[%s1 + $0x1f0] sm:$0xff]
    %v83 = vld [vmem:[%s1 + $0x1f8] sm:$0xff]
    %v84 = vld [vmem:[%s2] sm:$0x3]
    %v86 = vlaneseq
    %v87 = vshrl.u32 %v86, 7
    %v88 = vsub.s32 0, %v87
    %v89 = vrot.slane %v84, %v88
    %v90 = vlaneseq
    %v91 = vshrl.u32 %v90, 7
    %v92 = vsub.s32 1, %v91
    %v93 = vrot.slane %v84, %v92
    %v98 = vunpack.c.l.b16 %v18
    %v99 = vunpack.c.h.b16 %v18
    %v100 = vunpack.c.l.b16 %v19
    %v101 = vunpack.c.h.b16 %v19
    %v102 = vpack.c.b16 %v98, %v98
    %v103 = vpack.c.b16 %v99, %v99
    %v104 = vpack.c.b16 %v100, %v100
    %v105 = vpack.c.b16 %v101, %v101
    %v174 = vunpack.c.l.b16 %v20
    %v175 = vunpack.c.h.b16 %v20
    %v176 = vunpack.c.l.b16 %v21
    %v177 = vunpack.c.h.b16 %v21
    %v178 = vunpack.c.l.b16 %v22
    %v179 = vunpack.c.h.b16 %v22
    %v180 = vunpack.c.l.b16 %v23
    %v181 = vunpack.c.h.b16 %v23
    %v182 = vunpack.c.l.b16 %v24
    %v183 = vunpack.c.h.b16 %v24
    %v184 = vunpack.c.l.b16 %v25
    %v185 = vunpack.c.h.b16 %v25
    %v186 = vunpack.c.l.b16 %v26
    %v187 = vunpack.c.h.b16 %v26
    %v188 = vunpack.c.l.b16 %v27
    %v189 = vunpack.c.h.b16 %v27
    %v190 = vunpack.c.l.b16 %v28
    %v191 = vunpack.c.h.b16 %v28
    %v192 = vunpack.c.l.b16 %v29
    %v193 = vunpack.c.h.b16 %v29
    %v194 = vunpack.c.l.b16 %v30
    %v195 = vunpack.c.h.b16 %v30
    %v196 = vunpack.c.l.b16 %v31
    %v197 = vunpack.c.h.b16 %v31
    %v198 = vunpack.c.l.b16 %v32
    %v199 = vunpack.c.h.b16 %v32
    %v200 = vunpack.c.l.b16 %v33
    %v201 = vunpack.c.h.b16 %v33
    %v202 = vunpack.c.l.b16 %v34
    %v203 = vunpack.c.h.b16 %v34
    %v204 = vunpack.c.l.b16 %v35
    %v205 = vunpack.c.h.b16 %v35
    %v206 = vunpack.c.l.b16 %v36
    %v207 = vunpack.c.h.b16 %v36
    %v208 = vunpack.c.l.b16 %v37
    %v209 = vunpack.c.h.b16 %v37
    %v210 = vunpack.c.l.b16 %v38
    %v211 = vunpack.c.h.b16 %v38
    %v212 = vunpack.c.l.b16 %v39
    %v213 = vunpack.c.h.b16 %v39
    %v214 = vunpack.c.l.b16 %v40
    %v215 = vunpack.c.h.b16 %v40
    %v216 = vunpack.c.l.b16 %v41
    %v217 = vunpack.c.h.b16 %v41
    %v218 = vunpack.c.l.b16 %v42
    %v219 = vunpack.c.h.b16 %v42
    %v220 = vunpack.c.l.b16 %v43
    %v221 = vunpack.c.h.b16 %v43
    %v222 = vunpack.c.l.b16 %v44
    %v223 = vunpack.c.h.b16 %v44
    %v224 = vunpack.c.l.b16 %v45
    %v225 = vunpack.c.h.b16 %v45
    %v226 = vunpack.c.l.b16 %v46
    %v227 = vunpack.c.h.b16 %v46
    %v228 = vunpack.c.l.b16 %v47
    %v229 = vunpack.c.h.b16 %v47
    %v230 = vunpack.c.l.b16 %v48
    %v231 = vunpack.c.h.b16 %v48
    %v232 = vunpack.c.l.b16 %v49
    %v233 = vunpack.c.h.b16 %v49
    %v234 = vunpack.c.l.b16 %v50
    %v235 = vunpack.c.h.b16 %v50
    %v236 = vunpack.c.l.b16 %v51
    %v237 = vunpack.c.h.b16 %v51
    %v238 = vunpack.c.l.b16 %v52
    %v239 = vunpack.c.h.b16 %v52
    %v240 = vunpack.c.l.b16 %v53
    %v241 = vunpack.c.h.b16 %v53
    %v242 = vunpack.c.l.b16 %v54
    %v243 = vunpack.c.h.b16 %v54
    %v244 = vunpack.c.l.b16 %v55
    %v245 = vunpack.c.h.b16 %v55
    %v246 = vunpack.c.l.b16 %v56
    %v247 = vunpack.c.h.b16 %v56
    %v248 = vunpack.c.l.b16 %v57
    %v249 = vunpack.c.h.b16 %v57
    %v250 = vunpack.c.l.b16 %v58
    %v251 = vunpack.c.h.b16 %v58
    %v252 = vunpack.c.l.b16 %v59
    %v253 = vunpack.c.h.b16 %v59
    %v254 = vunpack.c.l.b16 %v60
    %v255 = vunpack.c.h.b16 %v60
    %v256 = vunpack.c.l.b16 %v61
    %v257 = vunpack.c.h.b16 %v61
    %v258 = vunpack.c.l.b16 %v62
    %v259 = vunpack.c.h.b16 %v62
    %v260 = vunpack.c.l.b16 %v63
    %v261 = vunpack.c.h.b16 %v63
    %v262 = vunpack.c.l.b16 %v64
    %v263 = vunpack.c.h.b16 %v64
    %v264 = vunpack.c.l.b16 %v65
    %v265 = vunpack.c.h.b16 %v65
    %v266 = vunpack.c.l.b16 %v66
    %v267 = vunpack.c.h.b16 %v66
    %v268 = vunpack.c.l.b16 %v67
    %v269 = vunpack.c.h.b16 %v67
    %v270 = vunpack.c.l.b16 %v68
    %v271 = vunpack.c.h.b16 %v68
    %v272 = vunpack.c.l.b16 %v69
    %v273 = vunpack.c.h.b16 %v69
    %v274 = vunpack.c.l.b16 %v70
    %v275 = vunpack.c.h.b16 %v70
    %v276 = vunpack.c.l.b16 %v71
    %v277 = vunpack.c.h.b16 %v71
    %v278 = vunpack.c.l.b16 %v72
    %v279 = vunpack.c.h.b16 %v72
    %v280 = vunpack.c.l.b16 %v73
    %v281 = vunpack.c.h.b16 %v73
    %v282 = vunpack.c.l.b16 %v74
    %v283 = vunpack.c.h.b16 %v74
    %v284 = vunpack.c.l.b16 %v75
    %v285 = vunpack.c.h.b16 %v75
    %v286 = vunpack.c.l.b16 %v76
    %v287 = vunpack.c.h.b16 %v76
    %v288 = vunpack.c.l.b16 %v77
    %v289 = vunpack.c.h.b16 %v77
    %v290 = vunpack.c.l.b16 %v78
    %v291 = vunpack.c.h.b16 %v78
    %v292 = vunpack.c.l.b16 %v79
    %v293 = vunpack.c.h.b16 %v79
    %v294 = vunpack.c.l.b16 %v80
    %v295 = vunpack.c.h.b16 %v80
    %v296 = vunpack.c.l.b16 %v81
    %v297 = vunpack.c.h.b16 %v81
    %v298 = vunpack.c.l.b16 %v82
    %v299 = vunpack.c.h.b16 %v82
    %v300 = vunpack.c.l.b16 %v83
    %v301 = vunpack.c.h.b16 %v83
    %v302 = vpack.c.b16 %v176, %v174
    %v303 = vpack.c.b16 %v177, %v175
    %v304 = vpack.c.b16 %v180, %v178
    %v305 = vpack.c.b16 %v181, %v179
    %v306 = vpack.c.b16 %v184, %v182
    %v307 = vpack.c.b16 %v185, %v183
    %v308 = vpack.c.b16 %v188, %v186
    %v309 = vpack.c.b16 %v189, %v187
    %v310 = vpack.c.b16 %v192, %v190
    %v311 = vpack.c.b16 %v193, %v191
    %v312 = vpack.c.b16 %v196, %v194
    %v313 = vpack.c.b16 %v197, %v195
    %v314 = vpack.c.b16 %v200, %v198
    %v315 = vpack.c.b16 %v201, %v199
    %v316 = vpack.c.b16 %v204, %v202
    %v317 = vpack.c.b16 %v205, %v203
    %v318 = vpack.c.b16 %v208, %v206
    %v319 = vpack.c.b16 %v209, %v207
    %v320 = vpack.c.b16 %v212, %v210
    %v321 = vpack.c.b16 %v213, %v211
    %v322 = vpack.c.b16 %v216, %v214
    %v323 = vpack.c.b16 %v217, %v215
    %v324 = vpack.c.b16 %v220, %v218
    %v325 = vpack.c.b16 %v221, %v219
    %v326 = vpack.c.b16 %v224, %v222
    %v327 = vpack.c.b16 %v225, %v223
    %v328 = vpack.c.b16 %v228, %v226
    %v329 = vpack.c.b16 %v229, %v227
    %v330 = vpack.c.b16 %v232, %v230
    %v331 = vpack.c.b16 %v233, %v231
    %v332 = vpack.c.b16 %v236, %v234
    %v333 = vpack.c.b16 %v237, %v235
    %v334 = vpack.c.b16 %v240, %v238
    %v335 = vpack.c.b16 %v241, %v239
    %v336 = vpack.c.b16 %v244, %v242
    %v337 = vpack.c.b16 %v245, %v243
    %v338 = vpack.c.b16 %v248, %v246
    %v339 = vpack.c.b16 %v249, %v247
    %v340 = vpack.c.b16 %v252, %v250
    %v341 = vpack.c.b16 %v253, %v251
    %v342 = vpack.c.b16 %v256, %v254
    %v343 = vpack.c.b16 %v257, %v255
    %v344 = vpack.c.b16 %v260, %v258
    %v345 = vpack.c.b16 %v261, %v259
    %v346 = vpack.c.b16 %v264, %v262
    %v347 = vpack.c.b16 %v265, %v263
    %v348 = vpack.c.b16 %v268, %v266
    %v349 = vpack.c.b16 %v269, %v267
    %v350 = vpack.c.b16 %v272, %v270
    %v351 = vpack.c.b16 %v273, %v271
    %v352 = vpack.c.b16 %v276, %v274
    %v353 = vpack.c.b16 %v277, %v275
    %v354 = vpack.c.b16 %v280, %v278
    %v355 = vpack.c.b16 %v281, %v279
    %v356 = vpack.c.b16 %v284, %v282
    %v357 = vpack.c.b16 %v285, %v283
    %v358 = vpack.c.b16 %v288, %v286
    %v359 = vpack.c.b16 %v289, %v287
    %v360 = vpack.c.b16 %v292, %v290
    %v361 = vpack.c.b16 %v293, %v291
    %v362 = vpack.c.b16 %v296, %v294
    %v363 = vpack.c.b16 %v297, %v295
    %v364 = vpack.c.b16 %v300, %v298
    %v365 = vpack.c.b16 %v301, %v299
    %430 = vmatprep.subr.bf16.mxu0 %v303
    %431 = vmatpush1.bf16.msra.mxu0 %v302
    %432 = vmatprep.subr.bf16.mxu0 %v305
    %433 = vmatpush1.bf16.msra.mxu0 %v304
    %434 = vmatprep.subr.bf16.mxu0 %v307
    %435 = vmatpush1.bf16.msra.mxu0 %v306
    %436 = vmatprep.subr.bf16.mxu0 %v309
    %437 = vmatpush1.bf16.msra.mxu0 %v308
    %438 = vmatprep.subr.bf16.mxu0 %v311
    %439 = vmatpush1.bf16.msra.mxu0 %v310
    %440 = vmatprep.subr.bf16.mxu0 %v313
    %441 = vmatpush1.bf16.msra.mxu0 %v312
    %442 = vmatprep.subr.bf16.mxu0 %v315
    %443 = vmatpush1.bf16.msra.mxu0 %v314
    %444 = vmatprep.subr.bf16.mxu0 %v317
    %445 = vmatpush1.bf16.msra.mxu0 %v316
    %446 = vmatprep.subr.bf16.mxu0 %v319
    %447 = vmatpush1.bf16.msra.mxu0 %v318
    %448 = vmatprep.subr.bf16.mxu0 %v321
    %449 = vmatpush1.bf16.msra.mxu0 %v320
    %450 = vmatprep.subr.bf16.mxu0 %v323
    %451 = vmatpush1.bf16.msra.mxu0 %v322
    %452 = vmatprep.subr.bf16.mxu0 %v325
    %453 = vmatpush1.bf16.msra.mxu0 %v324
    %454 = vmatprep.subr.bf16.mxu0 %v327
    %455 = vmatpush1.bf16.msra.mxu0 %v326
    %456 = vmatprep.subr.bf16.mxu0 %v329
    %457 = vmatpush1.bf16.msra.mxu0 %v328
    %458 = vmatprep.subr.bf16.mxu0 %v331
    %459 = vmatpush1.bf16.msra.mxu0 %v330
    %460 = vmatprep.subr.bf16.mxu0 %v333
    %461 = vmatpush1.bf16.msra.mxu0 %v332
    %462 = vmatprep.mubr.bf16.mxu0 %v103
    %463 = vmatmul.mubr.bf16.gmra.mrb[0].mxu0 %v102
    %v464 = vpop.f32.mrb[0].mxu0
    %v465 = vadd.f32 %v89, %v464
    %v466 = vpop.f32.mrb[0].mxu0
    %v467 = vadd.f32 %v93, %v466
    %v468 = vpop.f32.mrb[0].mxu0
    %v469 = vpop.f32.mrb[0].mxu0
    %470 = vdwg.mxu0
    %471 = vmatprep.subr.bf16.mxu0 %v335
    %472 = vmatpush1.bf16.msra.mxu0 %v334
    %473 = vmatprep.subr.bf16.mxu0 %v337
    %474 = vmatpush1.bf16.msra.mxu0 %v336
    %475 = vmatprep.subr.bf16.mxu0 %v339
    %476 = vmatpush1.bf16.msra.mxu0 %v338
    %477 = vmatprep.subr.bf16.mxu0 %v341
    %478 = vmatpush1.bf16.msra.mxu0 %v340
    %479 = vmatprep.subr.bf16.mxu0 %v343
    %480 = vmatpush1.bf16.msra.mxu0 %v342
    %481 = vmatprep.subr.bf16.mxu0 %v345
    %482 = vmatpush1.bf16.msra.mxu0 %v344
    %483 = vmatprep.subr.bf16.mxu0 %v347
    %484 = vmatpush1.bf16.msra.mxu0 %v346
    %485 = vmatprep.subr.bf16.mxu0 %v349
    %486 = vmatpush1.bf16.msra.mxu0 %v348
    %487 = vmatprep.subr.bf16.mxu0 %v351
    %488 = vmatpush1.bf16.msra.mxu0 %v350
    %489 = vmatprep.subr.bf16.mxu0 %v353
    %490 = vmatpush1.bf16.msra.mxu0 %v352
    %491 = vmatprep.subr.bf16.mxu0 %v355
    %492 = vmatpush1.bf16.msra.mxu0 %v354
    %493 = vmatprep.subr.bf16.mxu0 %v357
    %494 = vmatpush1.bf16.msra.mxu0 %v356
    %495 = vmatprep.subr.bf16.mxu0 %v359
    %496 = vmatpush1.bf16.msra.mxu0 %v358
    %497 = vmatprep.subr.bf16.mxu0 %v361
    %498 = vmatpush1.bf16.msra.mxu0 %v360
    %499 = vmatprep.subr.bf16.mxu0 %v363
    %500 = vmatpush1.bf16.msra.mxu0 %v362
    %501 = vmatprep.subr.bf16.mxu0 %v365
    %502 = vmatpush1.bf16.msra.mxu0 %v364
    %503 = vmatprep.mubr.bf16.mxu0 %v105
    %504 = vmatmul.mubr.bf16.gmra.mrb[0].mxu0 %v104
    %v505 = vpop.f32.mrb[0].mxu0
    %v506 = vadd.f32 %v465, %v505
    %v507 = vpop.f32.mrb[0].mxu0
    %v508 = vadd.f32 %v467, %v507
    %v509 = vpop.f32.mrb[0].mxu0
    %v510 = vpop.f32.mrb[0].mxu0
    %511 = vdwg.mxu0
    %v512 = vld [vmem:[%s3] sm:$0xff]
    %514 = vset.pattern.permute.xlu0 0
    %515 = vperm.xlu0 %514, %v512
    %v516 = vpop.permute.xlu0 %515
    %v518 = vsub.f32 %v506, %v516
    %v519 = vsub.f32 %v508, %v516
    %520 = vst [vmem:[#allocation2] sm:$0xff] %v518
    %521 = vst [vmem:[#allocation2 + $0x8] sm:$0xff] %v519
    // Predicated region
    $region18: #{_embedding_forward_impl.3} parent=1 // pred_check
      _
    $region19: #{_embedding_forward_impl.3} parent=1 // pred_check_branch
      %523 = sbr.rel (0) target = $region21
    $region20: #{_embedding_forward_impl.3} parent=1 // pred_region
      %s525 = ssub.s32 256, 256
      %526 = vsyncadd [#allocation3], %s525
      %s528 = sshll.u32 [#allocation2], 4
      %s529 = int_to_ptr.vmem [resolvable:$true] %s528
      %531 = dma.vmem_to_hbm [thread:$0]  %s529, 256, %s4, [#allocation3]
    $region21: #{_embedding_forward_impl.3} parent=1 // pred_fallthru
      _
    // Predicated region
    $region22: #{_embedding_forward_impl.3} parent=1 // pred_check
      _
    $region23: #{_embedding_forward_impl.3} parent=1 // pred_check_branch
      %533 = sbr.rel (0) target = $region25
    $region24: #{_embedding_forward_impl.3} parent=1 // pred_region
      %534 = dma.done [#allocation3], 256
    $region25: #{_embedding_forward_impl.3} parent=1 // pred_fallthru
      _
    %535 = vsyncpa [#allocation3], 1

// kernel: _embedding_forward_impl.2
$region0: #{_embedding_forward_impl.2}
  #allocation0 [shape = 'u32[]', space=smem, size = 0x4, offset = 0x4, fixed_abs, tag = 'smem constant byte address 0x4 - core index']
  #allocation1 [shape = 'u32[144,128]{1,0:T(1,128)}', space=vmem, size = 0x12000, scoped, tag = 'internal scratch']
  #allocation2 [shape = 'f32[8,1]{1,0:T(8,128)}', space=vmem, size = 0x1000, scoped, tag = 'scratch operand']
  #allocation3 [shape = 'f32[8,1]{1,0:T(8,128)}', space=vmem, size = 0x1000, scoped, tag = 'scratch operand']
  %s0 = inlined_call_operand.vmem [shape: bf16[8,32], index: 0, kind: input, shape index: {}]
  %s1 = inlined_call_operand.hbm [shape: bf16[32,128], index: 1, kind: input, shape index: {}]
  %s2 = inlined_call_operand.vmem [shape: f32[1,128], index: 2, kind: input, shape index: {}]
  %s3 = inlined_call_operand.hbm [shape: bf16[128,256], index: 3, kind: input, shape index: {}]
  %s4 = inlined_call_operand.vmem [shape: f32[1,256], index: 4, kind: input, shape index: {}]
  %s5 = inlined_call_operand.hbm [shape: bf16[256,512], index: 5, kind: input, shape index: {}]
  %s6 = inlined_call_operand.vmem [shape: f32[1,512], index: 6, kind: input, shape index: {}]
  %s7 = inlined_call_operand.hbm [shape: bf16[512,256], index: 7, kind: input, shape index: {}]
  %s8 = inlined_call_operand.vmem [shape: f32[1,256], index: 8, kind: input, shape index: {}]
  %s9 = inlined_call_operand.vmem [shape: bf16[8,512], index: 9, kind: output, shape index: {0}]
  %s10 = inlined_call_operand.vmem [shape: f32[8,1], index: 10, kind: output, shape index: {1}]
  %11 = xla_tuple %s9, %s10
  %s12 = sld [smem:[#allocation0]]
  $region78: #{_embedding_forward_impl.2} parent=0
    _
  %s14 = ssub.s32 1, %s12
  %s15 = scalar_select 0, %s14, %s12
  $region1: #{_embedding_forward_impl.2} parent=0
    #allocation4 [shape = 'u8[8192]{0}', space=vmem, size = 0x2000, scoped, tag = 'input window, operand 1, single buffered']
    #allocation5 [shape = 's32[1]{0}', space=sflag, size = 0x4, scoped, tag = 'scoped memory for _embedding_forward_impl.2']
    #allocation6 [shape = 'u8[65536]{0}', space=vmem, size = 0x10000, scoped, tag = 'input window, operand 3, single buffered']
    #allocation7 [shape = 's32[1]{0}', space=sflag, size = 0x4, scoped, tag = 'scoped memory for _embedding_forward_impl.2']
    #allocation8 [shape = 'u8[262144]{0}', space=vmem, size = 0x40000, scoped, tag = 'input window, operand 5, single buffered']
    #allocation9 [shape = 'u8[262144]{0}', space=vmem, size = 0x40000, scoped, tag = 'input window, operand 7, single buffered']
    #allocation10 [shape = 's32[1]{0}', space=sflag, size = 0x4, scoped, tag = 'scoped memory for _embedding_forward_impl.2']
    %16 = vsyncpa [#allocation5], 0
    %17 = vsyncpa [#allocation7], 0
    %18 = vsyncpa [#allocation10], 0
    // Predicated region
    $region2: #{_embedding_forward_impl.2} parent=1 // pred_check
      _
    $region3: #{_embedding_forward_impl.2} parent=1 // pred_check_branch
      %20 = sbr.rel (0) target = $region5
    $region4: #{_embedding_forward_impl.2} parent=1 // pred_region
      _
    $region5: #{_embedding_forward_impl.2} parent=1 // pred_fallthru
      _
    // Predicated region
    $region6: #{_embedding_forward_impl.2} parent=1 // pred_check
      _
    $region7: #{_embedding_forward_impl.2} parent=1 // pred_check_branch
      %22 = sbr.rel (0) target = $region9
    $region8: #{_embedding_forward_impl.2} parent=1 // pred_region
      %s24 = ssub.s32 256, 256
      %25 = vsyncadd [#allocation5], %s24
      %s26 = sshll.u32 [#allocation4], 4
      %s27 = int_to_ptr.vmem [resolvable:$true] %s26
      %32 = dma.hbm_to_vmem [thread:$0]  %s1, 256, %s27, [#allocation5], 64, 64, 4
    $region9: #{_embedding_forward_impl.2} parent=1 // pred_fallthru
      _
    // Predicated region
    $region10: #{_embedding_forward_impl.2} parent=1 // pred_check
      _
    $region11: #{_embedding_forward_impl.2} parent=1 // pred_check_branch
      %34 = sbr.rel (0) target = $region13
    $region12: #{_embedding_forward_impl.2} parent=1 // pred_region
      _
    $region13: #{_embedding_forward_impl.2} parent=1 // pred_fallthru
      _
    // Predicated region
    $region14: #{_embedding_forward_impl.2} parent=1 // pred_check
      _
    $region15: #{_embedding_forward_impl.2} parent=1 // pred_check_branch
      %36 = sbr.rel (0) target = $region17
    $region16: #{_embedding_forward_impl.2} parent=1 // pred_region
      %s38 = ssub.s32 2048, 2048
      %39 = vsyncadd [#allocation7], %s38
      %s40 = sshll.u32 [#allocation6], 4
      %s41 = int_to_ptr.vmem [resolvable:$true] %s40
      %46 = dma.hbm_to_vmem [thread:$0]  %s3, 2048, %s41, [#allocation7], 128, 128, 8
    $region17: #{_embedding_forward_impl.2} parent=1 // pred_fallthru
      _
    // Predicated region
    $region18: #{_embedding_forward_impl.2} parent=1 // pred_check
      _
    $region19: #{_embedding_forward_impl.2} parent=1 // pred_check_branch
      %48 = sbr.rel (0) target = $region21
    $region20: #{_embedding_forward_impl.2} parent=1 // pred_region
      _
    $region21: #{_embedding_forward_impl.2} parent=1 // pred_fallthru
      _
    // Predicated region
    $region22: #{_embedding_forward_impl.2} parent=1 // pred_check
      _
    $region23: #{_embedding_forward_impl.2} parent=1 // pred_check_branch
      %50 = sbr.rel (0) target = $region25
    $region24: #{_embedding_forward_impl.2} parent=1 // pred_region
      %s52 = ssub.s32 8192, 8192
      %53 = vsyncadd [#allocation7], %s52
      %s54 = sshll.u32 [#allocation8], 4
      %s55 = int_to_ptr.vmem [resolvable:$true] %s54
      %60 = dma.hbm_to_vmem [thread:$0]  %s5, 8192, %s55, [#allocation7], 256, 256, 16
    $region25: #{_embedding_forward_impl.2} parent=1 // pred_fallthru
      _
    // Predicated region
    $region26: #{_embedding_forward_impl.2} parent=1 // pred_check
      _
    $region27: #{_embedding_forward_impl.2} parent=1 // pred_check_branch
      %62 = sbr.rel (0) target = $region29
    $region28: #{_embedding_forward_impl.2} parent=1 // pred_region
      _
    $region29: #{_embedding_forward_impl.2} parent=1 // pred_fallthru
      _
    // Predicated region
    $region30: #{_embedding_forward_impl.2} parent=1 // pred_check
      _
    $region31: #{_embedding_forward_impl.2} parent=1 // pred_check_branch
      %64 = sbr.rel (0) target = $region33
    $region32: #{_embedding_forward_impl.2} parent=1 // pred_region
      %s66 = ssub.s32 8192, 8192
      %67 = vsyncadd [#allocation10], %s66
      %s68 = sshll.u32 [#allocation9], 4
      %s69 = int_to_ptr.vmem [resolvable:$true] %s68
      %74 = dma.hbm_to_vmem [thread:$0]  %s7, 8192, %s69, [#allocation10], 128, 128, 8
    $region33: #{_embedding_forward_impl.2} parent=1 // pred_fallthru
      _
    // Predicated region
    $region34: #{_embedding_forward_impl.2} parent=1 // pred_check
      _
    $region35: #{_embedding_forward_impl.2} parent=1 // pred_check_branch
      %76 = sbr.rel (0) target = $region37
    $region36: #{_embedding_forward_impl.2} parent=1 // pred_region
      _
    $region37: #{_embedding_forward_impl.2} parent=1 // pred_fallthru
      _
    // Predicated region
    $region38: #{_embedding_forward_impl.2} parent=1 // pred_check
      _
    $region39: #{_embedding_forward_impl.2} parent=1 // pred_check_branch
      %78 = sbr.rel (0) target = $region41
    $region40: #{_embedding_forward_impl.2} parent=1 // pred_region
      %79 = dma.done [#allocation5], 256
    $region41: #{_embedding_forward_impl.2} parent=1 // pred_fallthru
      _
    // Predicated region
    $region42: #{_embedding_forward_impl.2} parent=1 // pred_check
      _
    $region43: #{_embedding_forward_impl.2} parent=1 // pred_check_branch
      %81 = sbr.rel (0) target = $region45
    $region44: #{_embedding_forward_impl.2} parent=1 // pred_region
      %82 = dma.done [#allocation7], 2048
    $region45: #{_embedding_forward_impl.2} parent=1 // pred_fallthru
      _
    // Predicated region
    $region46: #{_embedding_forward_impl.2} parent=1 // pred_check
      _
    $region47: #{_embedding_forward_impl.2} parent=1 // pred_check_branch
      %84 = sbr.rel (0) target = $region49
    $region48: #{_embedding_forward_impl.2} parent=1 // pred_region
      %85 = dma.done [#allocation7], 8192
    $region49: #{_embedding_forward_impl.2} parent=1 // pred_fallthru
      _
    // Predicated region
    $region50: #{_embedding_forward_impl.2} parent=1 // pred_check
      _
    $region51: #{_embedding_forward_impl.2} parent=1 // pred_check_branch
      %87 = sbr.rel (0) target = $region53
    $region52: #{_embedding_forward_impl.2} parent=1 // pred_region
      %88 = dma.done [#allocation10], 8192
    $region53: #{_embedding_forward_impl.2} parent=1 // pred_fallthru
      _
    %p90 = scmp.eq.s32.totalorder 0, 0
    // Predicated region
    $region54: #{_embedding_forward_impl.2} parent=1 // pred_check
      %p91 = pneg %p90
    $region55: #{_embedding_forward_impl.2} parent=1 // pred_check_branch
      %93 = sbr.rel (%p91) target = $region57
    $region56: #{_embedding_forward_impl.2} parent=1 // pred_region
      %v94 = vld [vmem:[%s0] sm:$0xf]
      %v95 = vld [vmem:[#allocation4] sm:$0xf]
      %v96 = vld [vmem:[#allocation4 + $0x4] sm:$0xf]
      %v97 = vld [vmem:[#allocation4 + $0x8] sm:$0xf]
      %v98 = vld [vmem:[#allocation4 + $0xc] sm:$0xf]
      %v99 = vld [vmem:[%s2] sm:$0x1]
      %v101 = vlaneseq
      %v102 = vshrl.u32 %v101, 7
      %v103 = vsub.s32 0, %v102
      %v104 = vrot.slane %v99, %v103
      %v110 = vunpack.c.l.b16 %v95
      %v111 = vunpack.c.l.b16 %v96
      %v112 = vunpack.c.l.b16 %v97
      %v113 = vunpack.c.l.b16 %v98
      %v114 = vpack.c.b16 %v111, %v110
      %v115 = vpack.c.b16 %v113, %v112
      %vm118 = vcmask 261120
      %v120 = vsel %vm118, %v94, 0
      %122 = vmatprep.subr.bf16.mxu0 0
      %123 = vmatpush1.bf16.msra.mxu0 %v114
      %124 = vmatprep.subr.bf16.mxu0 0
      %125 = vmatpush1.bf16.msra.mxu0 %v115
      %126 = vmatprep.subr.bf16.mxu0 0
      %127 = vmatpush1.bf16.msra.mxu0 0
      %128 = vmatprep.subr.bf16.mxu0 0
      %129 = vmatpush1.bf16.msra.mxu0 0
      %130 = vmatprep.subr.bf16.mxu0 0
      %131 = vmatpush1.bf16.msra.mxu0 0
      %132 = vmatprep.subr.bf16.mxu0 0
      %133 = vmatpush1.bf16.msra.mxu0 0
      %134 = vmatprep.subr.bf16.mxu0 0
      %135 = vmatpush1.bf16.msra.mxu0 0
      %136 = vmatprep.subr.bf16.mxu0 0
      %137 = vmatpush1.bf16.msra.mxu0 0
      %138 = vmatprep.subr.bf16.mxu0 0
      %139 = vmatpush1.bf16.msra.mxu0 0
      %140 = vmatprep.subr.bf16.mxu0 0
      %141 = vmatpush1.bf16.msra.mxu0 0
      %142 = vmatprep.subr.bf16.mxu0 0
      %143 = vmatpush1.bf16.msra.mxu0 0
      %144 = vmatprep.subr.bf16.mxu0 0
      %145 = vmatpush1.bf16.msra.mxu0 0
      %146 = vmatprep.subr.bf16.mxu0 0
      %147 = vmatpush1.bf16.msra.mxu0 0
      %148 = vmatprep.subr.bf16.mxu0 0
      %149 = vmatpush1.bf16.msra.mxu0 0
      %150 = vmatprep.subr.bf16.mxu0 0
      %151 = vmatpush1.bf16.msra.mxu0 0
      %152 = vmatprep.subr.bf16.mxu0 0
      %153 = vmatpush1.bf16.msra.mxu0 0
      %154 = vmatprep.mubr.bf16.mxu0 0
      %155 = vmatmul.mubr.bf16.gmra.mrb[0].mxu0 %v120
      %v156 = vpop.f32.mrb[0].mxu0
      %v157 = vadd.f32 %v104, %v156
      %v158 = vpop.f32.mrb[0].mxu0
      %v159 = vpop.f32.mrb[0].mxu0
      %v160 = vpop.f32.mrb[0].mxu0
      %161 = vdwg.mxu0
      %v162 = vmax.f32 %v157, 0.0
      %v163 = vpack.c.bf16 %v162, %v162
      %v164 = vld [vmem:[#allocation6] sm:$0xff]
      %v165 = vld [vmem:[#allocation6 + $0x8] sm:$0xff]
      %v166 = vld [vmem:[#allocation6 + $0x10] sm:$0xff]
      %v167 = vld [vmem:[#allocation6 + $0x18] sm:$0xff]
      %v168 = vld [vmem:[#allocation6 + $0x20] sm:$0xff]
      %v169 = vld [vmem:[#allocation6 + $0x28] sm:$0xff]
      %v170 = vld [vmem:[#allocation6 + $0x30] sm:$0xff]
      %v171 = vld [vmem:[#allocation6 + $0x38] sm:$0xff]
      %v172 = vld [vmem:[#allocation6 + $0x40] sm:$0xff]
      %v173 = vld [vmem:[#allocation6 + $0x48] sm:$0xff]
      %v174 = vld [vmem:[#allocation6 + $0x50] sm:$0xff]
      %v175 = vld [vmem:[#allocation6 + $0x58] sm:$0xff]
      %v176 = vld [vmem:[#allocation6 + $0x60] sm:$0xff]
      %v177 = vld [vmem:[#allocation6 + $0x68] sm:$0xff]
      %v178 = vld [vmem:[#allocation6 + $0x70] sm:$0xff]
      %v179 = vld [vmem:[#allocation6 + $0x78] sm:$0xff]
      %v180 = vld [vmem:[%s4] sm:$0x3]
      %v182 = vlaneseq
      %v183 = vshrl.u32 %v182, 7
      %v184 = vsub.s32 0, %v183
      %v185 = vrot.slane %v180, %v184
      %v186 = vlaneseq
      %v187 = vshrl.u32 %v186, 7
      %v188 = vsub.s32 1, %v187
      %v189 = vrot.slane %v180, %v188
      %v208 = vunpack.c.l.b16 %v164
      %v209 = vunpack.c.h.b16 %v164
      %v210 = vunpack.c.l.b16 %v165
      %v211 = vunpack.c.h.b16 %v165
      %v212 = vunpack.c.l.b16 %v166
      %v213 = vunpack.c.h.b16 %v166
      %v214 = vunpack.c.l.b16 %v167
      %v215 = vunpack.c.h.b16 %v167
      %v216 = vunpack.c.l.b16 %v168
      %v217 = vunpack.c.h.b16 %v168
      %v218 = vunpack.c.l.b16 %v169
      %v219 = vunpack.c.h.b16 %v169
      %v220 = vunpack.c.l.b16 %v170
      %v221 = vunpack.c.h.b16 %v170
      %v222 = vunpack.c.l.b16 %v171
      %v223 = vunpack.c.h.b16 %v171
      %v224 = vunpack.c.l.b16 %v172
      %v225 = vunpack.c.h.b16 %v172
      %v226 = vunpack.c.l.b16 %v173
      %v227 = vunpack.c.h.b16 %v173
      %v228 = vunpack.c.l.b16 %v174
      %v229 = vunpack.c.h.b16 %v174
      %v230 = vunpack.c.l.b16 %v175
      %v231 = vunpack.c.h.b16 %v175
      %v232 = vunpack.c.l.b16 %v176
      %v233 = vunpack.c.h.b16 %v176
      %v234 = vunpack.c.l.b16 %v177
      %v235 = vunpack.c.h.b16 %v177
      %v236 = vunpack.c.l.b16 %v178
      %v237 = vunpack.c.h.b16 %v178
      %v238 = vunpack.c.l.b16 %v179
      %v239 = vunpack.c.h.b16 %v179
      %v240 = vpack.c.b16 %v210, %v208
      %v241 = vpack.c.b16 %v211, %v209
      %v242 = vpack.c.b16 %v214, %v212
      %v243 = vpack.c.b16 %v215, %v213
      %v244 = vpack.c.b16 %v218, %v216
      %v245 = vpack.c.b16 %v219, %v217
      %v246 = vpack.c.b16 %v222, %v220
      %v247 = vpack.c.b16 %v223, %v221
      %v248 = vpack.c.b16 %v226, %v224
      %v249 = vpack.c.b16 %v227, %v225
      %v250 = vpack.c.b16 %v230, %v228
      %v251 = vpack.c.b16 %v231, %v229
      %v252 = vpack.c.b16 %v234, %v232
      %v253 = vpack.c.b16 %v235, %v233
      %v254 = vpack.c.b16 %v238, %v236
      %v255 = vpack.c.b16 %v239, %v237
      %272 = vmatprep.subr.bf16.mxu0 %v241
      %273 = vmatpush1.bf16.msra.mxu0 %v240
      %274 = vmatprep.subr.bf16.mxu0 %v243
      %275 = vmatpush1.bf16.msra.mxu0 %v242
      %276 = vmatprep.subr.bf16.mxu0 %v245
      %277 = vmatpush1.bf16.msra.mxu0 %v244
      %278 = vmatprep.subr.bf16.mxu0 %v247
      %279 = vmatpush1.bf16.msra.mxu0 %v246
      %280 = vmatprep.subr.bf16.mxu0 %v249
      %281 = vmatpush1.bf16.msra.mxu0 %v248
      %282 = vmatprep.subr.bf16.mxu0 %v251
      %283 = vmatpush1.bf16.msra.mxu0 %v250
      %284 = vmatprep.subr.bf16.mxu0 %v253
      %285 = vmatpush1.bf16.msra.mxu0 %v252
      %286 = vmatprep.subr.bf16.mxu0 %v255
      %287 = vmatpush1.bf16.msra.mxu0 %v254
      %288 = vmatprep.subr.bf16.mxu0 0
      %289 = vmatpush1.bf16.msra.mxu0 0
      %290 = vmatprep.subr.bf16.mxu0 0
      %291 = vmatpush1.bf16.msra.mxu0 0
      %292 = vmatprep.subr.bf16.mxu0 0
      %293 = vmatpush1.bf16.msra.mxu0 0
      %294 = vmatprep.subr.bf16.mxu0 0
      %295 = vmatpush1.bf16.msra.mxu0 0
      %296 = vmatprep.subr.bf16.mxu0 0
      %297 = vmatpush1.bf16.msra.mxu0 0
      %298 = vmatprep.subr.bf16.mxu0 0
      %299 = vmatpush1.bf16.msra.mxu0 0
      %300 = vmatprep.subr.bf16.mxu0 0
      %301 = vmatpush1.bf16.msra.mxu0 0
      %302 = vmatprep.subr.bf16.mxu0 0
      %303 = vmatpush1.bf16.msra.mxu0 0
      %304 = vmatprep.mubr.bf16.mxu0 0
      %305 = vmatmul.mubr.bf16.gmra.mrb[0].mxu0 %v163
      %v306 = vpop.f32.mrb[0].mxu0
      %v307 = vadd.f32 %v185, %v306
      %v308 = vpop.f32.mrb[0].mxu0
      %v309 = vadd.f32 %v189, %v308
      %v310 = vpop.f32.mrb[0].mxu0
      %v311 = vpop.f32.mrb[0].mxu0
      %312 = vdwg.mxu0
      %v313 = vmax.f32 %v307, 0.0
      %v314 = vmax.f32 %v309, 0.0
      %v315 = vpack.c.bf16 %v313, %v313
      %v316 = vpack.c.bf16 %v314, %v314
      %v317 = vld [vmem:[#allocation8] sm:$0xff]
      %v318 = vld [vmem:[#allocation8 + $0x8] sm:$0xff]
      %v319 = vld [vmem:[#allocation8 + $0x10] sm:$0xff]
      %v320 = vld [vmem:[#allocation8 + $0x18] sm:$0xff]
      %v321 = vld [vmem:[#allocation8 + $0x20] sm:$0xff]
      %v322 = vld [vmem:[#allocation8 + $0x28] sm:$0xff]
      %v323 = vld [vmem:[#allocation8 + $0x30] sm:$0xff]
      %v324 = vld [vmem:[#allocation8 + $0x38] sm:$0xff]
      %v325 = vld [vmem:[#allocation8 + $0x40] sm:$0xff]
      %v326 = vld [vmem:[#allocation8 + $0x48] sm:$0xff]
      %v327 = vld [vmem:[#allocation8 + $0x50] sm:$0xff]
      %v328 = vld [vmem:[#allocation8 + $0x58] sm:$0xff]
      %v329 = vld [vmem:[#allocation8 + $0x60] sm:$0xff]
      %v330 = vld [vmem:[#allocation8 + $0x68] sm:$0xff]
      %v331 = vld [vmem:[#allocation8 + $0x70] sm:$0xff]
      %v332 = vld [vmem:[#allocation8 + $0x78] sm:$0xff]
      %v333 = vld [vmem:[#allocation8 + $0x80] sm:$0xff]
      %v334 = vld [vmem:[#allocation8 + $0x88] sm:$0xff]
      %v335 = vld [vmem:[#allocation8 + $0x90] sm:$0xff]
      %v336 = vld [vmem:[#allocation8 + $0x98] sm:$0xff]
      %v337 = vld [vmem:[#allocation8 + $0xa0] sm:$0xff]
      %v338 = vld [vmem:[#allocation8 + $0xa8] sm:$0xff]
      %v339 = vld [vmem:[#allocation8 + $0xb0] sm:$0xff]
      %v340 = vld [vmem:[#allocation8 + $0xb8] sm:$0xff]
      %v341 = vld [vmem:[#allocation8 + $0xc0] sm:$0xff]
      %v342 = vld [vmem:[#allocation8 + $0xc8] sm:$0xff]
      %v343 = vld [vmem:[#allocation8 + $0xd0] sm:$0xff]
      %v344 = vld [vmem:[#allocation8 + $0xd8] sm:$0xff]
      %v345 = vld [vmem:[#allocation8 + $0xe0] sm:$0xff]
      %v346 = vld [vmem:[#allocation8 + $0xe8] sm:$0xff]
      %v347 = vld [vmem:[#allocation8 + $0xf0] sm:$0xff]
      %v348 = vld [vmem:[#allocation8 + $0xf8] sm:$0xff]
      %v349 = vld [vmem:[#allocation8 + $0x100] sm:$0xff]
      %v350 = vld [vmem:[#allocation8 + $0x108] sm:$0xff]
      %v351 = vld [vmem:[#allocation8 + $0x110] sm:$0xff]
      %v352 = vld [vmem:[#allocation8 + $0x118] sm:$0xff]
      %v353 = vld [vmem:[#allocation8 + $0x120] sm:$0xff]
      %v354 = vld [vmem:[#allocation8 + $0x128] sm:$0xff]
      %v355 = vld [vmem:[#allocation8 + $0x130] sm:$0xff]
      %v356 = vld [vmem:[#allocation8 + $0x138] sm:$0xff]
      %v357 = vld [vmem:[#allocation8 + $0x140] sm:$0xff]
      %v358 = vld [vmem:[#allocation8 + $0x148] sm:$0xff]
      %v359 = vld [vmem:[#allocation8 + $0x150] sm:$0xff]
      %v360 = vld [vmem:[#allocation8 + $0x158] sm:$0xff]
      %v361 = vld [vmem:[#allocation8 + $0x160] sm:$0xff]
      %v362 = vld [vmem:[#allocation8 + $0x168] sm:$0xff]
      %v363 = vld [vmem:[#allocation8 + $0x170] sm:$0xff]
      %v364 = vld [vmem:[#allocation8 + $0x178] sm:$0xff]
      %v365 = vld [vmem:[#allocation8 + $0x180] sm:$0xff]
      %v366 = vld [vmem:[#allocation8 + $0x188] sm:$0xff]
      %v367 = vld [vmem:[#allocation8 + $0x190] sm:$0xff]
      %v368 = vld [vmem:[#allocation8 + $0x198] sm:$0xff]
      %v369 = vld [vmem:[#allocation8 + $0x1a0] sm:$0xff]
      %v370 = vld [vmem:[#allocation8 + $0x1a8] sm:$0xff]
      %v371 = vld [vmem:[#allocation8 + $0x1b0] sm:$0xff]
      %v372 = vld [vmem:[#allocation8 + $0x1b8] sm:$0xff]
      %v373 = vld [vmem:[#allocation8 + $0x1c0] sm:$0xff]
      %v374 = vld [vmem:[#allocation8 + $0x1c8] sm:$0xff]
      %v375 = vld [vmem:[#allocation8 + $0x1d0] sm:$0xff]
      %v376 = vld [vmem:[#allocation8 + $0x1d8] sm:$0xff]
      %v377 = vld [vmem:[#allocation8 + $0x1e0] sm:$0xff]
      %v378 = vld [vmem:[#allocation8 + $0x1e8] sm:$0xff]
      %v379 = vld [vmem:[#allocation8 + $0x1f0] sm:$0xff]
      %v380 = vld [vmem:[#allocation8 + $0x1f8] sm:$0xff]
      %v381 = vld [vmem:[%s6] sm:$0xf]
      %v383 = vlaneseq
      %v384 = vshrl.u32 %v383, 7
      %v385 = vsub.s32 0, %v384
      %v386 = vrot.slane %v381, %v385
      %v387 = vlaneseq
      %v388 = vshrl.u32 %v387, 7
      %v389 = vsub.s32 1, %v388
      %v390 = vrot.slane %v381, %v389
      %v391 = vlaneseq
      %v392 = vshrl.u32 %v391, 7
      %v393 = vsub.s32 2, %v392
      %v394 = vrot.slane %v381, %v393
      %v395 = vlaneseq
      %v396 = vshrl.u32 %v395, 7
      %v397 = vsub.s32 3, %v396
      %v398 = vrot.slane %v381, %v397
      %v467 = vunpack.c.l.b16 %v317
      %v468 = vunpack.c.h.b16 %v317
      %v469 = vunpack.c.l.b16 %v318
      %v470 = vunpack.c.h.b16 %v318
      %v471 = vunpack.c.l.b16 %v319
      %v472 = vunpack.c.h.b16 %v319
      %v473 = vunpack.c.l.b16 %v320
      %v474 = vunpack.c.h.b16 %v320
      %v475 = vunpack.c.l.b16 %v321
      %v476 = vunpack.c.h.b16 %v321
      %v477 = vunpack.c.l.b16 %v322
      %v478 = vunpack.c.h.b16 %v322
      %v479 = vunpack.c.l.b16 %v323
      %v480 = vunpack.c.h.b16 %v323
      %v481 = vunpack.c.l.b16 %v324
      %v482 = vunpack.c.h.b16 %v324
      %v483 = vunpack.c.l.b16 %v325
      %v484 = vunpack.c.h.b16 %v325
      %v485 = vunpack.c.l.b16 %v326
      %v486 = vunpack.c.h.b16 %v326
      %v487 = vunpack.c.l.b16 %v327
      %v488 = vunpack.c.h.b16 %v327
      %v489 = vunpack.c.l.b16 %v328
      %v490 = vunpack.c.h.b16 %v328
      %v491 = vunpack.c.l.b16 %v329
      %v492 = vunpack.c.h.b16 %v329
      %v493 = vunpack.c.l.b16 %v330
      %v494 = vunpack.c.h.b16 %v330
      %v495 = vunpack.c.l.b16 %v331
      %v496 = vunpack.c.h.b16 %v331
      %v497 = vunpack.c.l.b16 %v332
      %v498 = vunpack.c.h.b16 %v332
      %v499 = vunpack.c.l.b16 %v333
      %v500 = vunpack.c.h.b16 %v333
      %v501 = vunpack.c.l.b16 %v334
      %v502 = vunpack.c.h.b16 %v334
      %v503 = vunpack.c.l.b16 %v335
      %v504 = vunpack.c.h.b16 %v335
      %v505 = vunpack.c.l.b16 %v336
      %v506 = vunpack.c.h.b16 %v336
      %v507 = vunpack.c.l.b16 %v337
      %v508 = vunpack.c.h.b16 %v337
      %v509 = vunpack.c.l.b16 %v338
      %v510 = vunpack.c.h.b16 %v338
      %v511 = vunpack.c.l.b16 %v339
      %v512 = vunpack.c.h.b16 %v339
      %v513 = vunpack.c.l.b16 %v340
      %v514 = vunpack.c.h.b16 %v340
      %v515 = vunpack.c.l.b16 %v341
      %v516 = vunpack.c.h.b16 %v341
      %v517 = vunpack.c.l.b16 %v342
      %v518 = vunpack.c.h.b16 %v342
      %v519 = vunpack.c.l.b16 %v343
      %v520 = vunpack.c.h.b16 %v343
      %v521 = vunpack.c.l.b16 %v344
      %v522 = vunpack.c.h.b16 %v344
      %v523 = vunpack.c.l.b16 %v345
      %v524 = vunpack.c.h.b16 %v345
      %v525 = vunpack.c.l.b16 %v346
      %v526 = vunpack.c.h.b16 %v346
      %v527 = vunpack.c.l.b16 %v347
      %v528 = vunpack.c.h.b16 %v347
      %v529 = vunpack.c.l.b16 %v348
      %v530 = vunpack.c.h.b16 %v348
      %v531 = vunpack.c.l.b16 %v349
      %v532 = vunpack.c.h.b16 %v349
      %v533 = vunpack.c.l.b16 %v350
      %v534 = vunpack.c.h.b16 %v350
      %v535 = vunpack.c.l.b16 %v351
      %v536 = vunpack.c.h.b16 %v351
      %v537 = vunpack.c.l.b16 %v352
      %v538 = vunpack.c.h.b16 %v352
      %v539 = vunpack.c.l.b16 %v353
      %v540 = vunpack.c.h.b16 %v353
      %v541 = vunpack.c.l.b16 %v354
      %v542 = vunpack.c.h.b16 %v354
      %v543 = vunpack.c.l.b16 %v355
      %v544 = vunpack.c.h.b16 %v355
      %v545 = vunpack.c.l.b16 %v356
      %v546 = vunpack.c.h.b16 %v356
      %v547 = vunpack.c.l.b16 %v357
      %v548 = vunpack.c.h.b16 %v357
      %v549 = vunpack.c.l.b16 %v358
      %v550 = vunpack.c.h.b16 %v358
      %v551 = vunpack.c.l.b16 %v359
      %v552 = vunpack.c.h.b16 %v359
      %v553 = vunpack.c.l.b16 %v360
      %v554 = vunpack.c.h.b16 %v360
      %v555 = vunpack.c.l.b16 %v361
      %v556 = vunpack.c.h.b16 %v361
      %v557 = vunpack.c.l.b16 %v362
      %v558 = vunpack.c.h.b16 %v362
      %v559 = vunpack.c.l.b16 %v363
      %v560 = vunpack.c.h.b16 %v363
      %v561 = vunpack.c.l.b16 %v364
      %v562 = vunpack.c.h.b16 %v364
      %v563 = vunpack.c.l.b16 %v365
      %v564 = vunpack.c.h.b16 %v365
      %v565 = vunpack.c.l.b16 %v366
      %v566 = vunpack.c.h.b16 %v366
      %v567 = vunpack.c.l.b16 %v367
      %v568 = vunpack.c.h.b16 %v367
      %v569 = vunpack.c.l.b16 %v368
      %v570 = vunpack.c.h.b16 %v368
      %v571 = vunpack.c.l.b16 %v369
      %v572 = vunpack.c.h.b16 %v369
      %v573 = vunpack.c.l.b16 %v370
      %v574 = vunpack.c.h.b16 %v370
      %v575 = vunpack.c.l.b16 %v371
      %v576 = vunpack.c.h.b16 %v371
      %v577 = vunpack.c.l.b16 %v372
      %v578 = vunpack.c.h.b16 %v372
      %v579 = vunpack.c.l.b16 %v373
      %v580 = vunpack.c.h.b16 %v373
      %v581 = vunpack.c.l.b16 %v374
      %v582 = vunpack.c.h.b16 %v374
      %v583 = vunpack.c.l.b16 %v375
      %v584 = vunpack.c.h.b16 %v375
      %v585 = vunpack.c.l.b16 %v376
      %v586 = vunpack.c.h.b16 %v376
      %v587 = vunpack.c.l.b16 %v377
      %v588 = vunpack.c.h.b16 %v377
      %v589 = vunpack.c.l.b16 %v378
      %v590 = vunpack.c.h.b16 %v378
      %v591 = vunpack.c.l.b16 %v379
      %v592 = vunpack.c.h.b16 %v379
      %v593 = vunpack.c.l.b16 %v380
      %v594 = vunpack.c.h.b16 %v380
      %v595 = vpack.c.b16 %v471, %v467
      %v596 = vpack.c.b16 %v472, %v468
      %v597 = vpack.c.b16 %v473, %v469
      %v598 = vpack.c.b16 %v474, %v470
      %v599 = vpack.c.b16 %v479, %v475
      %v600 = vpack.c.b16 %v480, %v476
      %v601 = vpack.c.b16 %v481, %v477
      %v602 = vpack.c.b16 %v482, %v478
      %v603 = vpack.c.b16 %v487, %v483
      %v604 = vpack.c.b16 %v488, %v484
      %v605 = vpack.c.b16 %v489, %v485
      %v606 = vpack.c.b16 %v490, %v486
      %v607 = vpack.c.b16 %v495, %v491
      %v608 = vpack.c.b16 %v496, %v492
      %v609 = vpack.c.b16 %v497, %v493
      %v610 = vpack.c.b16 %v498, %v494
      %v611 = vpack.c.b16 %v503, %v499
      %v612 = vpack.c.b16 %v504, %v500
      %v613 = vpack.c.b16 %v505, %v501
      %v614 = vpack.c.b16 %v506, %v502
      %v615 = vpack.c.b16 %v511, %v507
      %v616 = vpack.c.b16 %v512, %v508
      %v617 = vpack.c.b16 %v513, %v509
      %v618 = vpack.c.b16 %v514, %v510
      %v619 = vpack.c.b16 %v519, %v515
      %v620 = vpack.c.b16 %v520, %v516
      %v621 = vpack.c.b16 %v521, %v517
      %v622 = vpack.c.b16 %v522, %v518
      %v623 = vpack.c.b16 %v527, %v523
      %v624 = vpack.c.b16 %v528, %v524
      %v625 = vpack.c.b16 %v529, %v525
      %v626 = vpack.c.b16 %v530, %v526
      %v627 = vpack.c.b16 %v535, %v531
      %v628 = vpack.c.b16 %v536, %v532
      %v629 = vpack.c.b16 %v537, %v533
      %v630 = vpack.c.b16 %v538, %v534
      %v631 = vpack.c.b16 %v543, %v539
      %v632 = vpack.c.b16 %v544, %v540
      %v633 = vpack.c.b16 %v545, %v541
      %v634 = vpack.c.b16 %v546, %v542
      %v635 = vpack.c.b16 %v551, %v547
      %v636 = vpack.c.b16 %v552, %v548
      %v637 = vpack.c.b16 %v553, %v549
      %v638 = vpack.c.b16 %v554, %v550
      %v639 = vpack.c.b16 %v559, %v555
      %v640 = vpack.c.b16 %v560, %v556
      %v641 = vpack.c.b16 %v561, %v557
      %v642 = vpack.c.b16 %v562, %v558
      %v643 = vpack.c.b16 %v567, %v563
      %v644 = vpack.c.b16 %v568, %v564
      %v645 = vpack.c.b16 %v569, %v565
      %v646 = vpack.c.b16 %v570, %v566
      %v647 = vpack.c.b16 %v575, %v571
      %v648 = vpack.c.b16 %v576, %v572
      %v649 = vpack.c.b16 %v577, %v573
      %v650 = vpack.c.b16 %v578, %v574
      %v651 = vpack.c.b16 %v583, %v579
      %v652 = vpack.c.b16 %v584, %v580
      %v653 = vpack.c.b16 %v585, %v581
      %v654 = vpack.c.b16 %v586, %v582
      %v655 = vpack.c.b16 %v591, %v587
      %v656 = vpack.c.b16 %v592, %v588
      %v657 = vpack.c.b16 %v593, %v589
      %v658 = vpack.c.b16 %v594, %v590
      %723 = vmatprep.subr.bf16.mxu0 %v596
      %724 = vmatpush1.bf16.msra.mxu0 %v595
      %725 = vmatprep.subr.bf16.mxu0 %v600
      %726 = vmatpush1.bf16.msra.mxu0 %v599
      %727 = vmatprep.subr.bf16.mxu0 %v604
      %728 = vmatpush1.bf16.msra.mxu0 %v603
      %729 = vmatprep.subr.bf16.mxu0 %v608
      %730 = vmatpush1.bf16.msra.mxu0 %v607
      %731 = vmatprep.subr.bf16.mxu0 %v612
      %732 = vmatpush1.bf16.msra.mxu0 %v611
      %733 = vmatprep.subr.bf16.mxu0 %v616
      %734 = vmatpush1.bf16.msra.mxu0 %v615
      %735 = vmatprep.subr.bf16.mxu0 %v620
      %736 = vmatpush1.bf16.msra.mxu0 %v619
      %737 = vmatprep.subr.bf16.mxu0 %v624
      %738 = vmatpush1.bf16.msra.mxu0 %v623
      %739 = vmatprep.subr.bf16.mxu0 %v628
      %740 = vmatpush1.bf16.msra.mxu0 %v627
      %741 = vmatprep.subr.bf16.mxu0 %v632
      %742 = vmatpush1.bf16.msra.mxu0 %v631
      %743 = vmatprep.subr.bf16.mxu0 %v636
      %744 = vmatpush1.bf16.msra.mxu0 %v635
      %745 = vmatprep.subr.bf16.mxu0 %v640
      %746 = vmatpush1.bf16.msra.mxu0 %v639
      %747 = vmatprep.subr.bf16.mxu0 %v644
      %748 = vmatpush1.bf16.msra.mxu0 %v643
      %749 = vmatprep.subr.bf16.mxu0 %v648
      %750 = vmatpush1.bf16.msra.mxu0 %v647
      %751 = vmatprep.subr.bf16.mxu0 %v652
      %752 = vmatpush1.bf16.msra.mxu0 %v651
      %753 = vmatprep.subr.bf16.mxu0 %v656
      %754 = vmatpush1.bf16.msra.mxu0 %v655
      %755 = vmatprep.mubr.bf16.mxu0 %v316
      %756 = vmatmul.mubr.bf16.gmra.mrb[0].mxu0 %v315
      %v757 = vpop.f32.mrb[0].mxu0
      %v758 = vadd.f32 %v386, %v757
      %v759 = vpop.f32.mrb[0].mxu0
      %v760 = vadd.f32 %v390, %v759
      %v761 = vpop.f32.mrb[0].mxu0
      %v762 = vpop.f32.mrb[0].mxu0
      %763 = vdwg.mxu0
      %764 = vmatprep.subr.bf16.mxu0 %v598
      %765 = vmatpush1.bf16.msra.mxu0 %v597
      %766 = vmatprep.subr.bf16.mxu0 %v602
      %767 = vmatpush1.bf16.msra.mxu0 %v601
      %768 = vmatprep.subr.bf16.mxu0 %v606
      %769 = vmatpush1.bf16.msra.mxu0 %v605
      %770 = vmatprep.subr.bf16.mxu0 %v610
      %771 = vmatpush1.bf16.msra.mxu0 %v609
      %772 = vmatprep.subr.bf16.mxu0 %v614
      %773 = vmatpush1.bf16.msra.mxu0 %v613
      %774 = vmatprep.subr.bf16.mxu0 %v618
      %775 = vmatpush1.bf16.msra.mxu0 %v617
      %776 = vmatprep.subr.bf16.mxu0 %v622
      %777 = vmatpush1.bf16.msra.mxu0 %v621
      %778 = vmatprep.subr.bf16.mxu0 %v626
      %779 = vmatpush1.bf16.msra.mxu0 %v625
      %780 = vmatprep.subr.bf16.mxu0 %v630
      %781 = vmatpush1.bf16.msra.mxu0 %v629
      %782 = vmatprep.subr.bf16.mxu0 %v634
      %783 = vmatpush1.bf16.msra.mxu0 %v633
      %784 = vmatprep.subr.bf16.mxu0 %v638
      %785 = vmatpush1.bf16.msra.mxu0 %v637
      %786 = vmatprep.subr.bf16.mxu0 %v642
      %787 = vmatpush1.bf16.msra.mxu0 %v641
      %788 = vmatprep.subr.bf16.mxu0 %v646
      %789 = vmatpush1.bf16.msra.mxu0 %v645
      %790 = vmatprep.subr.bf16.mxu0 %v650
      %791 = vmatpush1.bf16.msra.mxu0 %v649
      %792 = vmatprep.subr.bf16.mxu0 %v654
      %793 = vmatpush1.bf16.msra.mxu0 %v653
      %794 = vmatprep.subr.bf16.mxu0 %v658
      %795 = vmatpush1.bf16.msra.mxu0 %v657
      %796 = vmatprep.mubr.bf16.mxu0 %v316
      %797 = vmatmul.mubr.bf16.gmra.mrb[0].mxu0 %v315
      %v798 = vpop.f32.mrb[0].mxu0
      %v799 = vadd.f32 %v394, %v798
      %v800 = vpop.f32.mrb[0].mxu0
      %v801 = vadd.f32 %v398, %v800
      %v802 = vpop.f32.mrb[0].mxu0
      %v803 = vpop.f32.mrb[0].mxu0
      %804 = vdwg.mxu0
      %v805 = vmax.f32 %v758, 0.0
      %v806 = vmax.f32 %v760, 0.0
      %v807 = vmax.f32 %v799, 0.0
      %v808 = vmax.f32 %v801, 0.0
      %v809 = vpack.c.bf16 %v805, %v805
      %v810 = vpack.c.bf16 %v806, %v806
      %v811 = vpack.c.bf16 %v807, %v807
      %v812 = vpack.c.bf16 %v808, %v808
      %v817 = vunpack.c.l.b16 %v809
      %v818 = vunpack.c.l.b16 %v810
      %v819 = vunpack.c.l.b16 %v811
      %v820 = vunpack.c.l.b16 %v812
      %v821 = vpack.c.b16 %v818, %v817
      %v822 = vpack.c.b16 %v820, %v819
      %825 = vst [vmem:[%s9] sm:$0xff] %v821
      %826 = vst [vmem:[%s9 + $0x8] sm:$0xff] %v822
      %vm827 = vcmask 7168
      %828 = vst.msk [vmem:[#allocation2] sm:$0xff] %vm827, -inf
      %829 = vst.msk [vmem:[#allocation3] sm:$0xff] %vm827, 0.0
    $region57: #{_embedding_forward_impl.2} parent=1 // pred_fallthru
      _
    %v830 = vld [vmem:[%s9] sm:$0xff]
    %v831 = vld [vmem:[%s9 + $0x8] sm:$0xff]
    %v832 = vld [vmem:[#allocation9] sm:$0xff]
    %v833 = vld [vmem:[#allocation9 + $0x8] sm:$0xff]
    %v834 = vld [vmem:[#allocation9 + $0x10] sm:$0xff]
    %v835 = vld [vmem:[#allocation9 + $0x18] sm:$0xff]
    %v836 = vld [vmem:[#allocation9 + $0x20] sm:$0xff]
    %v837 = vld [vmem:[#allocation9 + $0x28] sm:$0xff]
    %v838 = vld [vmem:[#allocation9 + $0x30] sm:$0xff]
    %v839 = vld [vmem:[#allocation9 + $0x38] sm:$0xff]
    %v840 = vld [vmem:[#allocation9 + $0x40] sm:$0xff]
    %v841 = vld [vmem:[#allocation9 + $0x48] sm:$0xff]
    %v842 = vld [vmem:[#allocation9 + $0x50] sm:$0xff]
    %v843 = vld [vmem:[#allocation9 + $0x58] sm:$0xff]
    %v844 = vld [vmem:[#allocation9 + $0x60] sm:$0xff]
    %v845 = vld [vmem:[#allocation9 + $0x68] sm:$0xff]
    %v846 = vld [vmem:[#allocation9 + $0x70] sm:$0xff]
    %v847 = vld [vmem:[#allocation9 + $0x78] sm:$0xff]
    %v848 = vld [vmem:[#allocation9 + $0x80] sm:$0xff]
    %v849 = vld [vmem:[#allocation9 + $0x88] sm:$0xff]
    %v850 = vld [vmem:[#allocation9 + $0x90] sm:$0xff]
    %v851 = vld [vmem:[#allocation9 + $0x98] sm:$0xff]
    %v852 = vld [vmem:[#allocation9 + $0xa0] sm:$0xff]
    %v853 = vld [vmem:[#allocation9 + $0xa8] sm:$0xff]
    %v854 = vld [vmem:[#allocation9 + $0xb0] sm:$0xff]
    %v855 = vld [vmem:[#allocation9 + $0xb8] sm:$0xff]
    %v856 = vld [vmem:[#allocation9 + $0xc0] sm:$0xff]
    %v857 = vld [vmem:[#allocation9 + $0xc8] sm:$0xff]
    %v858 = vld [vmem:[#allocation9 + $0xd0] sm:$0xff]
    %v859 = vld [vmem:[#allocation9 + $0xd8] sm:$0xff]
    %v860 = vld [vmem:[#allocation9 + $0xe0] sm:$0xff]
    %v861 = vld [vmem:[#allocation9 + $0xe8] sm:$0xff]
    %v862 = vld [vmem:[#allocation9 + $0xf0] sm:$0xff]
    %v863 = vld [vmem:[#allocation9 + $0xf8] sm:$0xff]
    %v864 = vld [vmem:[#allocation9 + $0x100] sm:$0xff]
    %v865 = vld [vmem:[#allocation9 + $0x108] sm:$0xff]
    %v866 = vld [vmem:[#allocation9 + $0x110] sm:$0xff]
    %v867 = vld [vmem:[#allocation9 + $0x118] sm:$0xff]
    %v868 = vld [vmem:[#allocation9 + $0x120] sm:$0xff]
    %v869 = vld [vmem:[#allocation9 + $0x128] sm:$0xff]
    %v870 = vld [vmem:[#allocation9 + $0x130] sm:$0xff]
    %v871 = vld [vmem:[#allocation9 + $0x138] sm:$0xff]
    %v872 = vld [vmem:[#allocation9 + $0x140] sm:$0xff]
    %v873 = vld [vmem:[#allocation9 + $0x148] sm:$0xff]
    %v874 = vld [vmem:[#allocation9 + $0x150] sm:$0xff]
    %v875 = vld [vmem:[#allocation9 + $0x158] sm:$0xff]
    %v876 = vld [vmem:[#allocation9 + $0x160] sm:$0xff]
    %v877 = vld [vmem:[#allocation9 + $0x168] sm:$0xff]
    %v878 = vld [vmem:[#allocation9 + $0x170] sm:$0xff]
    %v879 = vld [vmem:[#allocation9 + $0x178] sm:$0xff]
    %v880 = vld [vmem:[#allocation9 + $0x180] sm:$0xff]
    %v881 = vld [vmem:[#allocation9 + $0x188] sm:$0xff]
    %v882 = vld [vmem:[#allocation9 + $0x190] sm:$0xff]
    %v883 = vld [vmem:[#allocation9 + $0x198] sm:$0xff]
    %v884 = vld [vmem:[#allocation9 + $0x1a0] sm:$0xff]
    %v885 = vld [vmem:[#allocation9 + $0x1a8] sm:$0xff]
    %v886 = vld [vmem:[#allocation9 + $0x1b0] sm:$0xff]
    %v887 = vld [vmem:[#allocation9 + $0x1b8] sm:$0xff]
    %v888 = vld [vmem:[#allocation9 + $0x1c0] sm:$0xff]
    %v889 = vld [vmem:[#allocation9 + $0x1c8] sm:$0xff]
    %v890 = vld [vmem:[#allocation9 + $0x1d0] sm:$0xff]
    %v891 = vld [vmem:[#allocation9 + $0x1d8] sm:$0xff]
    %v892 = vld [vmem:[#allocation9 + $0x1e0] sm:$0xff]
    %v893 = vld [vmem:[#allocation9 + $0x1e8] sm:$0xff]
    %v894 = vld [vmem:[#allocation9 + $0x1f0] sm:$0xff]
    %v895 = vld [vmem:[#allocation9 + $0x1f8] sm:$0xff]
    %v896 = vld [vmem:[%s8] sm:$0x3]
    %v898 = vlaneseq
    %v899 = vshrl.u32 %v898, 7
    %v900 = vsub.s32 0, %v899
    %v901 = vrot.slane %v896, %v900
    %v902 = vlaneseq
    %v903 = vshrl.u32 %v902, 7
    %v904 = vsub.s32 1, %v903
    %v905 = vrot.slane %v896, %v904
    %v910 = vunpack.c.l.b16 %v830
    %v911 = vunpack.c.h.b16 %v830
    %v912 = vunpack.c.l.b16 %v831
    %v913 = vunpack.c.h.b16 %v831
    %v914 = vpack.c.b16 %v910, %v910
    %v915 = vpack.c.b16 %v911, %v911
    %v916 = vpack.c.b16 %v912, %v912
    %v917 = vpack.c.b16 %v913, %v913
    %v986 = vunpack.c.l.b16 %v832
    %v987 = vunpack.c.h.b16 %v832
    %v988 = vunpack.c.l.b16 %v833
    %v989 = vunpack.c.h.b16 %v833
    %v990 = vunpack.c.l.b16 %v834
    %v991 = vunpack.c.h.b16 %v834
    %v992 = vunpack.c.l.b16 %v835
    %v993 = vunpack.c.h.b16 %v835
    %v994 = vunpack.c.l.b16 %v836
    %v995 = vunpack.c.h.b16 %v836
    %v996 = vunpack.c.l.b16 %v837
    %v997 = vunpack.c.h.b16 %v837
    %v998 = vunpack.c.l.b16 %v838
    %v999 = vunpack.c.h.b16 %v838
    %v1000 = vunpack.c.l.b16 %v839
    %v1001 = vunpack.c.h.b16 %v839
    %v1002 = vunpack.c.l.b16 %v840
    %v1003 = vunpack.c.h.b16 %v840
    %v1004 = vunpack.c.l.b16 %v841
    %v1005 = vunpack.c.h.b16 %v841
    %v1006 = vunpack.c.l.b16 %v842
    %v1007 = vunpack.c.h.b16 %v842
    %v1008 = vunpack.c.l.b16 %v843
    %v1009 = vunpack.c.h.b16 %v843
    %v1010 = vunpack.c.l.b16 %v844
    %v1011 = vunpack.c.h.b16 %v844
    %v1012 = vunpack.c.l.b16 %v845
    %v1013 = vunpack.c.h.b16 %v845
    %v1014 = vunpack.c.l.b16 %v846
    %v1015 = vunpack.c.h.b16 %v846
    %v1016 = vunpack.c.l.b16 %v847
    %v1017 = vunpack.c.h.b16 %v847
    %v1018 = vunpack.c.l.b16 %v848
    %v1019 = vunpack.c.h.b16 %v848
    %v1020 = vunpack.c.l.b16 %v849
    %v1021 = vunpack.c.h.b16 %v849
    %v1022 = vunpack.c.l.b16 %v850
    %v1023 = vunpack.c.h.b16 %v850
    %v1024 = vunpack.c.l.b16 %v851
    %v1025 = vunpack.c.h.b16 %v851
    %v1026 = vunpack.c.l.b16 %v852
    %v1027 = vunpack.c.h.b16 %v852
    %v1028 = vunpack.c.l.b16 %v853
    %v1029 = vunpack.c.h.b16 %v853
    %v1030 = vunpack.c.l.b16 %v854
    %v1031 = vunpack.c.h.b16 %v854
    %v1032 = vunpack.c.l.b16 %v855
    %v1033 = vunpack.c.h.b16 %v855
    %v1034 = vunpack.c.l.b16 %v856
    %v1035 = vunpack.c.h.b16 %v856
    %v1036 = vunpack.c.l.b16 %v857
    %v1037 = vunpack.c.h.b16 %v857
    %v1038 = vunpack.c.l.b16 %v858
    %v1039 = vunpack.c.h.b16 %v858
    %v1040 = vunpack.c.l.b16 %v859
    %v1041 = vunpack.c.h.b16 %v859
    %v1042 = vunpack.c.l.b16 %v860
    %v1043 = vunpack.c.h.b16 %v860
    %v1044 = vunpack.c.l.b16 %v861
    %v1045 = vunpack.c.h.b16 %v861
    %v1046 = vunpack.c.l.b16 %v862
    %v1047 = vunpack.c.h.b16 %v862
    %v1048 = vunpack.c.l.b16 %v863
    %v1049 = vunpack.c.h.b16 %v863
    %v1050 = vunpack.c.l.b16 %v864
    %v1051 = vunpack.c.h.b16 %v864
    %v1052 = vunpack.c.l.b16 %v865
    %v1053 = vunpack.c.h.b16 %v865
    %v1054 = vunpack.c.l.b16 %v866
    %v1055 = vunpack.c.h.b16 %v866
    %v1056 = vunpack.c.l.b16 %v867
    %v1057 = vunpack.c.h.b16 %v867
    %v1058 = vunpack.c.l.b16 %v868
    %v1059 = vunpack.c.h.b16 %v868
    %v1060 = vunpack.c.l.b16 %v869
    %v1061 = vunpack.c.h.b16 %v869
    %v1062 = vunpack.c.l.b16 %v870
    %v1063 = vunpack.c.h.b16 %v870
    %v1064 = vunpack.c.l.b16 %v871
    %v1065 = vunpack.c.h.b16 %v871
    %v1066 = vunpack.c.l.b16 %v872
    %v1067 = vunpack.c.h.b16 %v872
    %v1068 = vunpack.c.l.b16 %v873
    %v1069 = vunpack.c.h.b16 %v873
    %v1070 = vunpack.c.l.b16 %v874
    %v1071 = vunpack.c.h.b16 %v874
    %v1072 = vunpack.c.l.b16 %v875
    %v1073 = vunpack.c.h.b16 %v875
    %v1074 = vunpack.c.l.b16 %v876
    %v1075 = vunpack.c.h.b16 %v876
    %v1076 = vunpack.c.l.b16 %v877
    %v1077 = vunpack.c.h.b16 %v877
    %v1078 = vunpack.c.l.b16 %v878
    %v1079 = vunpack.c.h.b16 %v878
    %v1080 = vunpack.c.l.b16 %v879
    %v1081 = vunpack.c.h.b16 %v879
    %v1082 = vunpack.c.l.b16 %v880
    %v1083 = vunpack.c.h.b16 %v880
    %v1084 = vunpack.c.l.b16 %v881
    %v1085 = vunpack.c.h.b16 %v881
    %v1086 = vunpack.c.l.b16 %v882
    %v1087 = vunpack.c.h.b16 %v882
    %v1088 = vunpack.c.l.b16 %v883
    %v1089 = vunpack.c.h.b16 %v883
    %v1090 = vunpack.c.l.b16 %v884
    %v1091 = vunpack.c.h.b16 %v884
    %v1092 = vunpack.c.l.b16 %v885
    %v1093 = vunpack.c.h.b16 %v885
    %v1094 = vunpack.c.l.b16 %v886
    %v1095 = vunpack.c.h.b16 %v886
    %v1096 = vunpack.c.l.b16 %v887
    %v1097 = vunpack.c.h.b16 %v887
    %v1098 = vunpack.c.l.b16 %v888
    %v1099 = vunpack.c.h.b16 %v888
    %v1100 = vunpack.c.l.b16 %v889
    %v1101 = vunpack.c.h.b16 %v889
    %v1102 = vunpack.c.l.b16 %v890
    %v1103 = vunpack.c.h.b16 %v890
    %v1104 = vunpack.c.l.b16 %v891
    %v1105 = vunpack.c.h.b16 %v891
    %v1106 = vunpack.c.l.b16 %v892
    %v1107 = vunpack.c.h.b16 %v892
    %v1108 = vunpack.c.l.b16 %v893
    %v1109 = vunpack.c.h.b16 %v893
    %v1110 = vunpack.c.l.b16 %v894
    %v1111 = vunpack.c.h.b16 %v894
    %v1112 = vunpack.c.l.b16 %v895
    %v1113 = vunpack.c.h.b16 %v895
    %v1114 = vpack.c.b16 %v988, %v986
    %v1115 = vpack.c.b16 %v989, %v987
    %v1116 = vpack.c.b16 %v992, %v990
    %v1117 = vpack.c.b16 %v993, %v991
    %v1118 = vpack.c.b16 %v996, %v994
    %v1119 = vpack.c.b16 %v997, %v995
    %v1120 = vpack.c.b16 %v1000, %v998
    %v1121 = vpack.c.b16 %v1001, %v999
    %v1122 = vpack.c.b16 %v1004, %v1002
    %v1123 = vpack.c.b16 %v1005, %v1003
    %v1124 = vpack.c.b16 %v1008, %v1006
    %v1125 = vpack.c.b16 %v1009, %v1007
    %v1126 = vpack.c.b16 %v1012, %v1010
    %v1127 = vpack.c.b16 %v1013, %v1011
    %v1128 = vpack.c.b16 %v1016, %v1014
    %v1129 = vpack.c.b16 %v1017, %v1015
    %v1130 = vpack.c.b16 %v1020, %v1018
    %v1131 = vpack.c.b16 %v1021, %v1019
    %v1132 = vpack.c.b16 %v1024, %v1022
    %v1133 = vpack.c.b16 %v1025, %v1023
    %v1134 = vpack.c.b16 %v1028, %v1026
    %v1135 = vpack.c.b16 %v1029, %v1027
    %v1136 = vpack.c.b16 %v1032, %v1030
    %v1137 = vpack.c.b16 %v1033, %v1031
    %v1138 = vpack.c.b16 %v1036, %v1034
    %v1139 = vpack.c.b16 %v1037, %v1035
    %v1140 = vpack.c.b16 %v1040, %v1038
    %v1141 = vpack.c.b16 %v1041, %v1039
    %v1142 = vpack.c.b16 %v1044, %v1042
    %v1143 = vpack.c.b16 %v1045, %v1043
    %v1144 = vpack.c.b16 %v1048, %v1046
    %v1145 = vpack.c.b16 %v1049, %v1047
    %v1146 = vpack.c.b16 %v1052, %v1050
    %v1147 = vpack.c.b16 %v1053, %v1051
    %v1148 = vpack.c.b16 %v1056, %v1054
    %v1149 = vpack.c.b16 %v1057, %v1055
    %v1150 = vpack.c.b16 %v1060, %v1058
    %v1151 = vpack.c.b16 %v1061, %v1059
    %v1152 = vpack.c.b16 %v1064, %v1062
    %v1153 = vpack.c.b16 %v1065, %v1063
    %v1154 = vpack.c.b16 %v1068, %v1066
    %v1155 = vpack.c.b16 %v1069, %v1067
    %v1156 = vpack.c.b16 %v1072, %v1070
    %v1157 = vpack.c.b16 %v1073, %v1071
    %v1158 = vpack.c.b16 %v1076, %v1074
    %v1159 = vpack.c.b16 %v1077, %v1075
    %v1160 = vpack.c.b16 %v1080, %v1078
    %v1161 = vpack.c.b16 %v1081, %v1079
    %v1162 = vpack.c.b16 %v1084, %v1082
    %v1163 = vpack.c.b16 %v1085, %v1083
    %v1164 = vpack.c.b16 %v1088, %v1086
    %v1165 = vpack.c.b16 %v1089, %v1087
    %v1166 = vpack.c.b16 %v1092, %v1090
    %v1167 = vpack.c.b16 %v1093, %v1091
    %v1168 = vpack.c.b16 %v1096, %v1094
    %v1169 = vpack.c.b16 %v1097, %v1095
    %v1170 = vpack.c.b16 %v1100, %v1098
    %v1171 = vpack.c.b16 %v1101, %v1099
    %v1172 = vpack.c.b16 %v1104, %v1102
    %v1173 = vpack.c.b16 %v1105, %v1103
    %v1174 = vpack.c.b16 %v1108, %v1106
    %v1175 = vpack.c.b16 %v1109, %v1107
    %v1176 = vpack.c.b16 %v1112, %v1110
    %v1177 = vpack.c.b16 %v1113, %v1111
    %1242 = vmatprep.subr.bf16.mxu0 %v1115
    %1243 = vmatpush1.bf16.msra.mxu0 %v1114
    %1244 = vmatprep.subr.bf16.mxu0 %v1117
    %1245 = vmatpush1.bf16.msra.mxu0 %v1116
    %1246 = vmatprep.subr.bf16.mxu0 %v1119
    %1247 = vmatpush1.bf16.msra.mxu0 %v1118
    %1248 = vmatprep.subr.bf16.mxu0 %v1121
    %1249 = vmatpush1.bf16.msra.mxu0 %v1120
    %1250 = vmatprep.subr.bf16.mxu0 %v1123
    %1251 = vmatpush1.bf16.msra.mxu0 %v1122
    %1252 = vmatprep.subr.bf16.mxu0 %v1125
    %1253 = vmatpush1.bf16.msra.mxu0 %v1124
    %1254 = vmatprep.subr.bf16.mxu0 %v1127
    %1255 = vmatpush1.bf16.msra.mxu0 %v1126
    %1256 = vmatprep.subr.bf16.mxu0 %v1129
    %1257 = vmatpush1.bf16.msra.mxu0 %v1128
    %1258 = vmatprep.subr.bf16.mxu0 %v1131
    %1259 = vmatpush1.bf16.msra.mxu0 %v1130
    %1260 = vmatprep.subr.bf16.mxu0 %v1133
    %1261 = vmatpush1.bf16.msra.mxu0 %v1132
    %1262 = vmatprep.subr.bf16.mxu0 %v1135
    %1263 = vmatpush1.bf16.msra.mxu0 %v1134
    %1264 = vmatprep.subr.bf16.mxu0 %v1137
    %1265 = vmatpush1.bf16.msra.mxu0 %v1136
    %1266 = vmatprep.subr.bf16.mxu0 %v1139
    %1267 = vmatpush1.bf16.msra.mxu0 %v1138
    %1268 = vmatprep.subr.bf16.mxu0 %v1141
    %1269 = vmatpush1.bf16.msra.mxu0 %v1140
    %1270 = vmatprep.subr.bf16.mxu0 %v1143
    %1271 = vmatpush1.bf16.msra.mxu0 %v1142
    %1272 = vmatprep.subr.bf16.mxu0 %v1145
    %1273 = vmatpush1.bf16.msra.mxu0 %v1144
    %1274 = vmatprep.mubr.bf16.mxu0 %v915
    %1275 = vmatmul.mubr.bf16.gmra.mrb[0].mxu0 %v914
    %v1276 = vpop.f32.mrb[0].mxu0
    %v1277 = vadd.f32 %v901, %v1276
    %v1278 = vpop.f32.mrb[0].mxu0
    %v1279 = vadd.f32 %v905, %v1278
    %v1280 = vpop.f32.mrb[0].mxu0
    %v1281 = vpop.f32.mrb[0].mxu0
    %1282 = vdwg.mxu0
    %1283 = vmatprep.subr.bf16.mxu0 %v1147
    %1284 = vmatpush1.bf16.msra.mxu0 %v1146
    %1285 = vmatprep.subr.bf16.mxu0 %v1149
    %1286 = vmatpush1.bf16.msra.mxu0 %v1148
    %1287 = vmatprep.subr.bf16.mxu0 %v1151
    %1288 = vmatpush1.bf16.msra.mxu0 %v1150
    %1289 = vmatprep.subr.bf16.mxu0 %v1153
    %1290 = vmatpush1.bf16.msra.mxu0 %v1152
    %1291 = vmatprep.subr.bf16.mxu0 %v1155
    %1292 = vmatpush1.bf16.msra.mxu0 %v1154
    %1293 = vmatprep.subr.bf16.mxu0 %v1157
    %1294 = vmatpush1.bf16.msra.mxu0 %v1156
    %1295 = vmatprep.subr.bf16.mxu0 %v1159
    %1296 = vmatpush1.bf16.msra.mxu0 %v1158
    %1297 = vmatprep.subr.bf16.mxu0 %v1161
    %1298 = vmatpush1.bf16.msra.mxu0 %v1160
    %1299 = vmatprep.subr.bf16.mxu0 %v1163
    %1300 = vmatpush1.bf16.msra.mxu0 %v1162
    %1301 = vmatprep.subr.bf16.mxu0 %v1165
    %1302 = vmatpush1.bf16.msra.mxu0 %v1164
    %1303 = vmatprep.subr.bf16.mxu0 %v1167
    %1304 = vmatpush1.bf16.msra.mxu0 %v1166
    %1305 = vmatprep.subr.bf16.mxu0 %v1169
    %1306 = vmatpush1.bf16.msra.mxu0 %v1168
    %1307 = vmatprep.subr.bf16.mxu0 %v1171
    %1308 = vmatpush1.bf16.msra.mxu0 %v1170
    %1309 = vmatprep.subr.bf16.mxu0 %v1173
    %1310 = vmatpush1.bf16.msra.mxu0 %v1172
    %1311 = vmatprep.subr.bf16.mxu0 %v1175
    %1312 = vmatpush1.bf16.msra.mxu0 %v1174
    %1313 = vmatprep.subr.bf16.mxu0 %v1177
    %1314 = vmatpush1.bf16.msra.mxu0 %v1176
    %1315 = vmatprep.mubr.bf16.mxu0 %v917
    %1316 = vmatmul.mubr.bf16.gmra.mrb[0].mxu0 %v916
    %v1317 = vpop.f32.mrb[0].mxu0
    %v1318 = vadd.f32 %v1277, %v1317
    %v1319 = vpop.f32.mrb[0].mxu0
    %v1320 = vadd.f32 %v1279, %v1319
    %v1321 = vpop.f32.mrb[0].mxu0
    %v1322 = vpop.f32.mrb[0].mxu0
    %1323 = vdwg.mxu0
    %v1324 = vld [vmem:[#allocation2] sm:$0xff]
    %v1325 = vmax.f32 %v1318, %v1320
    %1326 = vmax.xlane.f32.xlu0 %v1325
    %v1327 = vpop.xlane.xlu0 %1326
    %v1328 = vmax.f32 %v1324, %v1327
    %v1329 = vld [vmem:[#allocation3] sm:$0xff]
    %v1330 = vsub.f32 %v1324, %v1328
    %v1331 = vmul.f32 %v1330, 1.442695
    %v1332 = vpow.pop %v1331
    %v1333 = vmul.f32 %v1329, %v1332
    %1335 = vset.pattern.permute.xlu0 0
    %1336 = vperm.xlu0 %1335, %v1328
    %v1337 = vpop.permute.xlu0 %1336
    %v1339 = vsub.f32 %v1318, %v1337
    %v1340 = vsub.f32 %v1320, %v1337
    %v1341 = vmul.f32 %v1339, 1.442695
    %v1342 = vpow.pop %v1341
    %v1343 = vmul.f32 %v1340, 1.442695
    %v1344 = vpow.pop %v1343
    %v1345 = vadd.f32 %v1342, %v1344
    %1346 = vadd.xlane.f32.xlu0 %v1345
    %v1347 = vpop.xlane.xlu0 %1346
    %v1348 = vadd.f32 %v1333, %v1347
    %vm1349 = vcmask 7168
    %1350 = vst.msk [vmem:[#allocation3] sm:$0xff] %vm1349, %v1348
    %1351 = vst.msk [vmem:[#allocation2] sm:$0xff] %vm1349, %v1328
    // Predicated region
    $region58: #{_embedding_forward_impl.2} parent=1 // pred_check
      %p1352 = pneg %p90
    $region59: #{_embedding_forward_impl.2} parent=1 // pred_check_branch
      %1354 = sbr.rel (%p1352) target = $region61
    $region60: #{_embedding_forward_impl.2} parent=1 // pred_region
      %v1355 = vld [vmem:[#allocation2] sm:$0xff]
      %v1356 = vld [vmem:[#allocation3] sm:$0xff]
      %v1357 = vlog2.pop %v1356
      %v1358 = vmul.f32 %v1357, 0.6931472
      %v1359 = vadd.f32 %v1355, %v1358
      %1360 = vst.msk [vmem:[%s10] sm:$0xff] %vm1349, %v1359
    $region61: #{_embedding_forward_impl.2} parent=1 // pred_fallthru
      _
    // Predicated region
    $region62: #{_embedding_forward_impl.2} parent=1 // pred_check
      _
    $region63: #{_embedding_forward_impl.2} parent=1 // pred_check_branch
      %1362 = sbr.rel (0) target = $region65
    $region64: #{_embedding_forward_impl.2} parent=1 // pred_region
      _
    $region65: #{_embedding_forward_impl.2} parent=1 // pred_fallthru
      _
    // Predicated region
    $region66: #{_embedding_forward_impl.2} parent=1 // pred_check
      _
    $region67: #{_embedding_forward_impl.2} parent=1 // pred_check_branch
      %1364 = sbr.rel (0) target = $region69
    $region68: #{_embedding_forward_impl.2} parent=1 // pred_region
      _
    $region69: #{_embedding_forward_impl.2} parent=1 // pred_fallthru
      _
    // Predicated region
    $region70: #{_embedding_forward_impl.2} parent=1 // pred_check
      _
    $region71: #{_embedding_forward_impl.2} parent=1 // pred_check_branch
      %1366 = sbr.rel (0) target = $region73
    $region72: #{_embedding_forward_impl.2} parent=1 // pred_region
      _
    $region73: #{_embedding_forward_impl.2} parent=1 // pred_fallthru
      _
    // Predicated region
    $region74: #{_embedding_forward_impl.2} parent=1 // pred_check
      _
    $region75: #{_embedding_forward_impl.2} parent=1 // pred_check_branch
      %1368 = sbr.rel (0) target = $region77
    $region76: #{_embedding_forward_impl.2} parent=1 // pred_region
      _
    $region77: #{_embedding_forward_impl.2} parent=1 // pred_fallthru
      _
    %1369 = vsyncpa [#allocation5], 1
    %1370 = vsyncpa [#allocation7], 1
    %1371 = vsyncpa [#allocation10], 1

</llo_original>
